<compile_context>
chip_gen: v6e
topology: v6e:2x2x1
jax: 0.10.0
libtpu: 0.0.40
codegen_flags: <defaults>
</compile_context>

<pallas_src>
import math
import functools

import jax
import jax.numpy as jnp
from jax.experimental import pallas as pl
from jax.experimental.pallas import tpu as pltpu


# ----------------------------- math helpers --------------------------------

def _layernorm(x, gamma, beta, eps=1e-5):
    # PyTorch nn.LayerNorm: biased variance over last dim, eps inside sqrt.
    mean = jnp.mean(x, axis=-1, keepdims=True)
    var = jnp.mean(jnp.square(x - mean), axis=-1, keepdims=True)
    return (x - mean) * jax.lax.rsqrt(var + eps) * gamma + beta


def _gelu(x):
    # TODO(synk): F.gelu default is the exact erf-based GELU; erf is not
    # reliably lowerable in Mosaic, so the tanh approximation is used here.
    c = math.sqrt(2.0 / math.pi)
    return 0.5 * x * (1.0 + jnp.tanh(c * (x + 0.044715 * x * x * x)))


# ------------------------------- the kernel --------------------------------

def transformer_layer_kernel(
    x_ref,                                    # (S, H)  f32, read at layer==0
    wqkv_ref, wo_ref, w1_ref, w2_ref,         # per-layer bf16 weight blocks
    bqkv_ref, bo_ref, g1_ref, be1_ref,        # per-layer f32 (1, ·) params
    bf1_ref, bf2_ref, g2_ref, be2_ref,
    o_ref,                                    # (S, H)  f32 output block
    h_ref,                                    # (S, H)  f32 VMEM carry scratch
    *, num_heads, head_dim):
    S = x_ref.shape[0]
    H = num_heads * head_dim
    attn_eps = 1e-6
    inv_scale = 1.0 / (math.sqrt(head_dim) + attn_eps)   # folded into q once

    layer = pl.program_id(1)

    @pl.when(layer == 0)
    def _init():
        h_ref[...] = x_ref[...]

    h = h_ref[...]

    # causal mask: strictly-upper triangle masked (mask == -inf -> -10000.0 in
    # the PyTorch module; the parent CausalTransformer builds a causal mask).
    row = jax.lax.broadcasted_iota(jnp.int32, (S, S), 0)
    col = jax.lax.broadcasted_iota(jnp.int32, (S, S), 1)
    causal = col > row

    # ---------------- multi-head self attention ----------------
    # One fused (S,H)@(H,3H) projection; bf16 weights, f32 accumulation.
    qkv = jnp.dot(h, wqkv_ref[...], preferred_element_type=jnp.float32) \
        + bqkv_ref[...]
    q_all = qkv[:, :H] * inv_scale           # scale folded into q (not scores)
    k_all = qkv[:, H:2 * H]
    v_all = qkv[:, 2 * H:]

    ctx_heads = []
    for n in range(num_heads):               # static unroll over heads
        s0 = n * head_dim
        qh = q_all[:, s0:s0 + head_dim]
        kh = k_all[:, s0:s0 + head_dim]
        vh = v_all[:, s0:s0 + head_dim]

        # QK^T without materializing a transpose: contract the last dims.
        scores = jax.lax.dot_general(
            qh, kh, (((1,), (1,)), ((), ())),
            preferred_element_type=jnp.float32)          # (S, S)
        scores = jnp.clip(scores, -100.0, 100.0)
        scores = jnp.where(causal, -10000.0, scores)

        m = jnp.max(scores, axis=-1, keepdims=True)
        e = jnp.exp(scores - m)
        se = jnp.sum(e, axis=-1, keepdims=True)
        inv_se = pl.reciprocal(se, approx=True)          # EUP, not VPU divide
        p = e * inv_se
        # (p + eps) / sum(p + eps); sum(p + eps) == se*inv_se + S*eps, so no
        # second (S,S) reduction is needed for the renormalization.
        renorm = pl.reciprocal(se * inv_se + S * attn_eps, approx=True)
        p = (p + attn_eps) * renorm

        ctx_heads.append(jnp.dot(p, vh, preferred_element_type=jnp.float32))

    ctx = jnp.concatenate(ctx_heads, axis=-1)            # (S, H)
    # Single K=H output projection (instead of per-head K=head_dim matmuls).
    attn = jnp.dot(ctx, wo_ref[...], preferred_element_type=jnp.float32) \
        + bo_ref[...]
    # NOTE: the PyTorch isnan->0 scrub is omitted; it is a no-op unless NaNs
    # occur and only adds a full (S,H) VPU pass.

    # x = x + norm1(attn)   (norm applied to the branch, per the module)
    h = h + _layernorm(attn, g1_ref[...], be1_ref[...])

    # ---------------- position-wise feed forward ----------------
    f = jnp.dot(h, w1_ref[...], preferred_element_type=jnp.float32) \
        + bf1_ref[...]
    f = _gelu(f)
    f = jnp.dot(f, w2_ref[...], preferred_element_type=jnp.float32) \
        + bf2_ref[...]
    h = h + _layernorm(f, g2_ref[...], be2_ref[...])

    h_ref[...] = h

    @pl.when(layer == pl.num_programs(1) - 1)
    def _finalize():
        o_ref[...] = h_ref[...]


# ------------------------------- wrapper ------------------------------------

def transformer_stack(x, params, *, num_heads):
    B, S, H = x.shape
    L = params["wq"].shape[0]
    F = params["w1"].shape[2]
    head_dim = H // num_heads

    # Fuse the Q/K/V projection weights/biases once in the wrapper (free).
    wqkv = jnp.concatenate([params["wq"], params["wk"], params["wv"]], axis=2)
    bqkv = jnp.concatenate([params["bq"], params["bk"], params["bv"]], axis=2)

    kernel = functools.partial(
        transformer_layer_kernel, num_heads=num_heads, head_dim=head_dim)

    operands = (
        x, wqkv, params["wo"], params["w1"], params["w2"],
        bqkv, params["bo"], params["g1"], params["be1"],
        params["bf1"], params["bf2"], params["g2"], params["be2"],
    )

    in_specs = [
        pl.BlockSpec((None, S, H), lambda b, l: (b, 0, 0)),        # x
        pl.BlockSpec((None, H, 3 * H), lambda b, l: (l, 0, 0)),    # wqkv (bf16)
        pl.BlockSpec((None, H, H), lambda b, l: (l, 0, 0)),        # wo   (bf16)
        pl.BlockSpec((None, H, F), lambda b, l: (l, 0, 0)),        # w1   (bf16)
        pl.BlockSpec((None, F, H), lambda b, l: (l, 0, 0)),        # w2   (bf16)
        pl.BlockSpec((None, 1, 3 * H), lambda b, l: (l, 0, 0)),    # bqkv
        pl.BlockSpec((None, 1, H), lambda b, l: (l, 0, 0)),        # bo
        pl.BlockSpec((None, 1, H), lambda b, l: (l, 0, 0)),        # g1
        pl.BlockSpec((None, 1, H), lambda b, l: (l, 0, 0)),        # be1
        pl.BlockSpec((None, 1, F), lambda b, l: (l, 0, 0)),        # bf1
        pl.BlockSpec((None, 1, H), lambda b, l: (l, 0, 0)),        # bf2
        pl.BlockSpec((None, 1, H), lambda b, l: (l, 0, 0)),        # g2
        pl.BlockSpec((None, 1, H), lambda b, l: (l, 0, 0)),        # be2
    ]

    return pl.pallas_call(
        kernel,
        out_shape=jax.ShapeDtypeStruct((B, S, H), jnp.float32),
        grid=(B, L),                                  # layers stream innermost
        in_specs=in_specs,
        out_specs=pl.BlockSpec((None, S, H), lambda b, l: (b, 0, 0)),
        scratch_shapes=[pltpu.VMEM((S, H), jnp.float32)],   # resident h carry
        compiler_params=pltpu.CompilerParams(
            dimension_semantics=("parallel", "arbitrary"),
            # above the 32 MiB scoped default, still safely below v7x's 64 MiB
            # physical VMEM; re-derive for large configs.
            vmem_limit_bytes=48 * 1024 * 1024),
    )(*operands)


# --------------------- deterministic parameter init ------------------------

def make_params(key, hidden_dim, num_layers, num_heads, ff_dim):
    keys = iter(jax.random.split(key, 32))

    def xavier(shape):
        fan_in, fan_out = shape[-2], shape[-1]
        bound = math.sqrt(6.0 / (fan_in + fan_out))
        return jax.random.uniform(next(keys), shape, jnp.float32, -bound, bound)

    def lin_bias(shape, fan_in):
        bound = 1.0 / math.sqrt(fan_in)
        return jax.random.uniform(next(keys), shape, jnp.float32, -bound, bound)

    L, H, F = num_layers, hidden_dim, ff_dim
    bf16 = jnp.bfloat16  # matmul weights stored in bf16 (halves HBM/VMEM)

    return dict(
        wq=xavier((L, H, H)).astype(bf16), bq=lin_bias((L, 1, H), H),
        wk=xavier((L, H, H)).astype(bf16), bk=lin_bias((L, 1, H), H),
        wv=xavier((L, H, H)).astype(bf16), bv=lin_bias((L, 1, H), H),
        wo=xavier((L, H, H)).astype(bf16), bo=lin_bias((L, 1, H), H),
        g1=jnp.ones((L, 1, H), jnp.float32), be1=jnp.zeros((L, 1, H), jnp.float32),
        w1=xavier((L, H, F)).astype(bf16), bf1=lin_bias((L, 1, F), H),
        w2=xavier((L, F, H)).astype(bf16), bf2=lin_bias((L, 1, H), F),
        g2=jnp.ones((L, 1, H), jnp.float32), be2=jnp.zeros((L, 1, H), jnp.float32),
    )


# -------------------------- pure-JAX reference ------------------------------

def reference_forward(x, params, *, num_heads):
    B, S, H = x.shape
    L = params["wq"].shape[0]
    head_dim = H // num_heads
    eps = 1e-6
    scale = math.sqrt(head_dim) + eps
    f32 = jnp.float32

    h = x
    row = jnp.arange(S)[:, None]
    col = jnp.arange(S)[None, :]
    causal = col > row

    for l in range(L):
        q = h @ params["wq"][l].astype(f32) + params["bq"][l]
        k = h @ params["wk"][l].astype(f32) + params["bk"][l]
        v = h @ params["wv"][l].astype(f32) + params["bv"][l]
        q = q.reshape(B, S, num_heads, head_dim).transpose(0, 2, 1, 3)
        k = k.reshape(B, S, num_heads, head_dim).transpose(0, 2, 1, 3)
        v = v.reshape(B, S, num_heads, head_dim).transpose(0, 2, 1, 3)
        scores = jnp.einsum("bhqd,bhkd->bhqk", q, k) / scale
        scores = jnp.clip(scores, -100.0, 100.0)
        scores = jnp.where(causal[None, None], -10000.0, scores)
        p = jax.nn.softmax(scores, axis=-1)
        p = p + eps
        p = p / jnp.sum(p, axis=-1, keepdims=True)
        ctx = jnp.einsum("bhqk,bhkd->bhqd", p, v)
        ctx = ctx.transpose(0, 2, 1, 3).reshape(B, S, H)
        attn = ctx @ params["wo"][l].astype(f32) + params["bo"][l]
        h = h + _layernorm(attn, params["g1"][l], params["be1"][l])
        f = h @ params["w1"][l].astype(f32) + params["bf1"][l]
        f = _gelu(f)
        f = f @ params["w2"][l].astype(f32) + params["bf2"][l]
        h = h + _layernorm(f, params["g2"][l], params["be2"][l])
    return h


# --------------------------------- main --------------------------------------

if __name__ == "__main__":
    batch, seq_len = 2, 16
    hidden_dim, num_heads = 128, 4        # 128 keeps every block lane-dense
    ff_dim, num_layers = 256, 2

    key = jax.random.PRNGKey(0)
    kx, kp = jax.random.split(key)
    x = jax.random.normal(kx, (batch, seq_len, hidden_dim), jnp.float32)
    params = make_params(kp, hidden_dim, num_layers, num_heads, ff_dim)

    out = jax.block_until_ready(transformer_stack(x, params, num_heads=num_heads))
    ref = jax.block_until_ready(reference_forward(x, params, num_heads=num_heads))

    if not bool(jnp.allclose(out, ref, atol=1e-2, rtol=1e-2)):
        max_err = float(jnp.max(jnp.abs(out - ref)))
        raise AssertionError(
            f"Pallas kernel output diverges from JAX reference (max err {max_err})")

    print("KERNEL_OK")
</pallas_src>

<mosaic_0001>
module attributes {stable_mosaic.version = 11 : i64} {
  func.func @transformer_layer_kernel(%arg0: i32, %arg1: i32, %arg2: memref<1x16x128xf32, #tpu.memory_space<vmem>>, %arg3: memref<1x128x384xbf16, #tpu.memory_space<vmem>>, %arg4: memref<1x128x128xbf16, #tpu.memory_space<vmem>>, %arg5: memref<1x128x256xbf16, #tpu.memory_space<vmem>>, %arg6: memref<1x256x128xbf16, #tpu.memory_space<vmem>>, %arg7: memref<1x1x384xf32, #tpu.memory_space<vmem>>, %arg8: memref<1x1x128xf32, #tpu.memory_space<vmem>>, %arg9: memref<1x1x128xf32, #tpu.memory_space<vmem>>, %arg10: memref<1x1x128xf32, #tpu.memory_space<vmem>>, %arg11: memref<1x1x256xf32, #tpu.memory_space<vmem>>, %arg12: memref<1x1x128xf32, #tpu.memory_space<vmem>>, %arg13: memref<1x1x128xf32, #tpu.memory_space<vmem>>, %arg14: memref<1x1x128xf32, #tpu.memory_space<vmem>>, %arg15: memref<1x16x128xf32, #tpu.memory_space<vmem>>, %arg16: memref<16x128xf32, #tpu.memory_space<vmem>>) attributes {dimension_semantics = [#tpu.dimension_semantics<parallel>, #tpu.dimension_semantics<arbitrary>], iteration_bounds = array<i64: 2, 2>, scalar_prefetch = 0 : i64, scratch_operands = 1 : i64, tpu.core_type = #tpu.core_type<tc>, window_params = [{transform_indices = @transform_0, window_bounds = array<i64: 1, 16, 128>}, {transform_indices = @transform_1, window_bounds = array<i64: 1, 128, 384>}, {transform_indices = @transform_2, window_bounds = array<i64: 1, 128, 128>}, {transform_indices = @transform_3, window_bounds = array<i64: 1, 128, 256>}, {transform_indices = @transform_4, window_bounds = array<i64: 1, 256, 128>}, {transform_indices = @transform_5, window_bounds = array<i64: 1, 1, 384>}, {transform_indices = @transform_6, window_bounds = array<i64: 1, 1, 128>}, {transform_indices = @transform_7, window_bounds = array<i64: 1, 1, 128>}, {transform_indices = @transform_8, window_bounds = array<i64: 1, 1, 128>}, {transform_indices = @transform_9, window_bounds = array<i64: 1, 1, 256>}, {transform_indices = @transform_10, window_bounds = array<i64: 1, 1, 128>}, {transform_indices = @transform_11, window_bounds = array<i64: 1, 1, 128>}, {transform_indices = @transform_12, window_bounds = array<i64: 1, 1, 128>}, {transform_indices = @transform_13, window_bounds = array<i64: 1, 16, 128>}]} {
    %c0_i32 = arith.constant 0 : i32
    %0 = arith.cmpi eq, %arg1, %c0_i32 : i32
    %1 = arith.extui %0 : i1 to i32
    %c0_i32_0 = arith.constant 0 : i32
    %2 = arith.cmpi ne, %1, %c0_i32_0 : i32
    scf.if %2 {
      %c0_95 = arith.constant 0 : index
      %c0_96 = arith.constant 0 : index
      %c0_97 = arith.constant 0 : index
      %228 = vector.load %arg2[%c0_95, %c0_96, %c0_97] : memref<1x16x128xf32, #tpu.memory_space<vmem>>, vector<1x16x128xf32>
      %229 = vector.shape_cast %228 : vector<1x16x128xf32> to vector<16x128xf32>
      %c0_98 = arith.constant 0 : index
      %c0_99 = arith.constant 0 : index
      %230 = vector.load %arg16[%c0_98, %c0_99] : memref<16x128xf32, #tpu.memory_space<vmem>>, vector<16x128xf32>
      tpu.vector_store %arg16[%c0_98, %c0_99], %229 {strides = array<i32>} : memref<16x128xf32, #tpu.memory_space<vmem>>, vector<16x128xf32>,
    } else {
    }
    %c0 = arith.constant 0 : index
    %c0_1 = arith.constant 0 : index
    %3 = vector.load %arg16[%c0, %c0_1] : memref<16x128xf32, #tpu.memory_space<vmem>>, vector<16x128xf32>
    %4 = tpu.iota {dimensions = array<i32: 0>} : vector<16x16xi32>
    %5 = tpu.iota {dimensions = array<i32: 1>} : vector<16x16xi32>
    %6 = arith.cmpi sgt, %5, %4 : vector<16x16xi32>
    %c0_2 = arith.constant 0 : index
    %c0_3 = arith.constant 0 : index
    %c0_4 = arith.constant 0 : index
    %7 = vector.load %arg3[%c0_2, %c0_3, %c0_4] : memref<1x128x384xbf16, #tpu.memory_space<vmem>>, vector<1x128x384xbf16>
    %8 = vector.shape_cast %7 : vector<1x128x384xbf16> to vector<128x384xbf16>
    %cst = arith.constant dense<0.000000e+00> : vector<16x384xf32>
    %9 = tpu.matmul %3, %8, %cst {dimension_numbers = #tpu.dot_dimension_numbers<[1], [0], [0], [1], [0, 0, 1, 1], [], []>} : vector<16x128xf32>, vector<128x384xbf16>, vector<16x384xf32> -> vector<16x384xf32>
    %c0_5 = arith.constant 0 : index
    %c0_6 = arith.constant 0 : index
    %c0_7 = arith.constant 0 : index
    %10 = vector.load %arg7[%c0_5, %c0_6, %c0_7] : memref<1x1x384xf32, #tpu.memory_space<vmem>>, vector<1x1x384xf32>
    %11 = vector.shape_cast %10 : vector<1x1x384xf32> to vector<1x384xf32>
    %12 = vector.broadcast %11 : vector<1x384xf32> to vector<16x384xf32>
    %13 = arith.addf %9, %12 : vector<16x384xf32>
    %14 = vector.extract_strided_slice %13 {offsets = [0, 0], sizes = [16, 128], strides = [1, 1]} : vector<16x384xf32> to vector<16x128xf32>
    %cst_8 = arith.constant 0.176776662 : f32
    %15 = vector.broadcast %cst_8 : f32 to vector<16x128xf32>
    %16 = arith.mulf %14, %15 : vector<16x128xf32>
    %17 = vector.extract_strided_slice %13 {offsets = [0, 128], sizes = [16, 128], strides = [1, 1]} : vector<16x384xf32> to vector<16x128xf32>
    %18 = vector.extract_strided_slice %13 {offsets = [0, 256], sizes = [16, 128], strides = [1, 1]} : vector<16x384xf32> to vector<16x128xf32>
    %19 = vector.extract_strided_slice %16 {offsets = [0, 0], sizes = [16, 32], strides = [1, 1]} : vector<16x128xf32> to vector<16x32xf32>
    %20 = vector.extract_strided_slice %17 {offsets = [0, 0], sizes = [16, 32], strides = [1, 1]} : vector<16x128xf32> to vector<16x32xf32>
    %21 = vector.extract_strided_slice %18 {offsets = [0, 0], sizes = [16, 32], strides = [1, 1]} : vector<16x128xf32> to vector<16x32xf32>
    %cst_9 = arith.constant dense<0.000000e+00> : vector<16x16xf32>
    %22 = tpu.matmul %19, %20, %cst_9 {dimension_numbers = #tpu.dot_dimension_numbers<[1], [1], [0], [0], [0, 0, 1, 0], [], []>} : vector<16x32xf32>, vector<16x32xf32>, vector<16x16xf32> -> vector<16x16xf32>
    %cst_10 = arith.constant -1.000000e+02 : f32
    %cst_11 = arith.constant 1.000000e+02 : f32
    %23 = vector.broadcast %cst_10 : f32 to vector<16x16xf32>
    %24 = arith.maximumf %23, %22 : vector<16x16xf32>
    %25 = vector.broadcast %cst_11 : f32 to vector<16x16xf32>
    %26 = arith.minimumf %25, %24 : vector<16x16xf32>
    %cst_12 = arith.constant -1.000000e+04 : f32
    %27 = vector.broadcast %cst_12 : f32 to vector<16x16xf32>
    %28 = arith.select %6, %27, %26 : vector<16x16xi1>, vector<16x16xf32>
    %cst_13 = arith.constant dense<0xFF800000> : vector<16xf32>
    %29 = vector.multi_reduction <maximumf>, %28, %cst_13 [1] : vector<16x16xf32> to vector<16xf32>
    %30 = vector.shape_cast %29 : vector<16xf32> to vector<16x1xf32>
    %31 = vector.broadcast %30 : vector<16x1xf32> to vector<16x16xf32>
    %32 = arith.subf %28, %31 : vector<16x16xf32>
    %33 = math.exp %32 : vector<16x16xf32>
    %cst_14 = arith.constant dense<0.000000e+00> : vector<16xf32>
    %34 = vector.multi_reduction <add>, %33, %cst_14 [1] : vector<16x16xf32> to vector<16xf32>
    %35 = vector.shape_cast %34 : vector<16xf32> to vector<16x1xf32>
    %36 = tpu.reciprocal %35 {approx = true} : vector<16x1xf32> -> vector<16x1xf32>
    %37 = vector.broadcast %36 : vector<16x1xf32> to vector<16x16xf32>
    %38 = arith.mulf %33, %37 : vector<16x16xf32>
    %39 = arith.mulf %35, %36 : vector<16x1xf32>
    %cst_15 = arith.constant 1.600000e-05 : f32
    %40 = vector.broadcast %cst_15 : f32 to vector<16x1xf32>
    %41 = arith.addf %39, %40 : vector<16x1xf32>
    %42 = tpu.reciprocal %41 {approx = true} : vector<16x1xf32> -> vector<16x1xf32>
    %cst_16 = arith.constant 9.99999997E-7 : f32
    %43 = vector.broadcast %cst_16 : f32 to vector<16x16xf32>
    %44 = arith.addf %38, %43 : vector<16x16xf32>
    %45 = vector.broadcast %42 : vector<16x1xf32> to vector<16x16xf32>
    %46 = arith.mulf %44, %45 : vector<16x16xf32>
    %cst_17 = arith.constant dense<0.000000e+00> : vector<16x32xf32>
    %47 = tpu.matmul %46, %21, %cst_17 {dimension_numbers = #tpu.dot_dimension_numbers<[1], [0], [0], [1], [0, 0, 1, 1], [], []>} : vector<16x16xf32>, vector<16x32xf32>, vector<16x32xf32> -> vector<16x32xf32>
    %48 = vector.extract_strided_slice %16 {offsets = [0, 32], sizes = [16, 32], strides = [1, 1]} : vector<16x128xf32> to vector<16x32xf32>
    %49 = vector.extract_strided_slice %17 {offsets = [0, 32], sizes = [16, 32], strides = [1, 1]} : vector<16x128xf32> to vector<16x32xf32>
    %50 = vector.extract_strided_slice %18 {offsets = [0, 32], sizes = [16, 32], strides = [1, 1]} : vector<16x128xf32> to vector<16x32xf32>
    %cst_18 = arith.constant dense<0.000000e+00> : vector<16x16xf32>
    %51 = tpu.matmul %48, %49, %cst_18 {dimension_numbers = #tpu.dot_dimension_numbers<[1], [1], [0], [0], [0, 0, 1, 0], [], []>} : vector<16x32xf32>, vector<16x32xf32>, vector<16x16xf32> -> vector<16x16xf32>
    %cst_19 = arith.constant -1.000000e+02 : f32
    %cst_20 = arith.constant 1.000000e+02 : f32
    %52 = vector.broadcast %cst_19 : f32 to vector<16x16xf32>
    %53 = arith.maximumf %52, %51 : vector<16x16xf32>
    %54 = vector.broadcast %cst_20 : f32 to vector<16x16xf32>
    %55 = arith.minimumf %54, %53 : vector<16x16xf32>
    %cst_21 = arith.constant -1.000000e+04 : f32
    %56 = vector.broadcast %cst_21 : f32 to vector<16x16xf32>
    %57 = arith.select %6, %56, %55 : vector<16x16xi1>, vector<16x16xf32>
    %cst_22 = arith.constant dense<0xFF800000> : vector<16xf32>
    %58 = vector.multi_reduction <maximumf>, %57, %cst_22 [1] : vector<16x16xf32> to vector<16xf32>
    %59 = vector.shape_cast %58 : vector<16xf32> to vector<16x1xf32>
    %60 = vector.broadcast %59 : vector<16x1xf32> to vector<16x16xf32>
    %61 = arith.subf %57, %60 : vector<16x16xf32>
    %62 = math.exp %61 : vector<16x16xf32>
    %cst_23 = arith.constant dense<0.000000e+00> : vector<16xf32>
    %63 = vector.multi_reduction <add>, %62, %cst_23 [1] : vector<16x16xf32> to vector<16xf32>
    %64 = vector.shape_cast %63 : vector<16xf32> to vector<16x1xf32>
    %65 = tpu.reciprocal %64 {approx = true} : vector<16x1xf32> -> vector<16x1xf32>
    %66 = vector.broadcast %65 : vector<16x1xf32> to vector<16x16xf32>
    %67 = arith.mulf %62, %66 : vector<16x16xf32>
    %68 = arith.mulf %64, %65 : vector<16x1xf32>
    %cst_24 = arith.constant 1.600000e-05 : f32
    %69 = vector.broadcast %cst_24 : f32 to vector<16x1xf32>
    %70 = arith.addf %68, %69 : vector<16x1xf32>
    %71 = tpu.reciprocal %70 {approx = true} : vector<16x1xf32> -> vector<16x1xf32>
    %cst_25 = arith.constant 9.99999997E-7 : f32
    %72 = vector.broadcast %cst_25 : f32 to vector<16x16xf32>
    %73 = arith.addf %67, %72 : vector<16x16xf32>
    %74 = vector.broadcast %71 : vector<16x1xf32> to vector<16x16xf32>
    %75 = arith.mulf %73, %74 : vector<16x16xf32>
    %cst_26 = arith.constant dense<0.000000e+00> : vector<16x32xf32>
    %76 = tpu.matmul %75, %50, %cst_26 {dimension_numbers = #tpu.dot_dimension_numbers<[1], [0], [0], [1], [0, 0, 1, 1], [], []>} : vector<16x16xf32>, vector<16x32xf32>, vector<16x32xf32> -> vector<16x32xf32>
    %77 = vector.extract_strided_slice %16 {offsets = [0, 64], sizes = [16, 32], strides = [1, 1]} : vector<16x128xf32> to vector<16x32xf32>
    %78 = vector.extract_strided_slice %17 {offsets = [0, 64], sizes = [16, 32], strides = [1, 1]} : vector<16x128xf32> to vector<16x32xf32>
    %79 = vector.extract_strided_slice %18 {offsets = [0, 64], sizes = [16, 32], strides = [1, 1]} : vector<16x128xf32> to vector<16x32xf32>
    %cst_27 = arith.constant dense<0.000000e+00> : vector<16x16xf32>
    %80 = tpu.matmul %77, %78, %cst_27 {dimension_numbers = #tpu.dot_dimension_numbers<[1], [1], [0], [0], [0, 0, 1, 0], [], []>} : vector<16x32xf32>, vector<16x32xf32>, vector<16x16xf32> -> vector<16x16xf32>
    %cst_28 = arith.constant -1.000000e+02 : f32
    %cst_29 = arith.constant 1.000000e+02 : f32
    %81 = vector.broadcast %cst_28 : f32 to vector<16x16xf32>
    %82 = arith.maximumf %81, %80 : vector<16x16xf32>
    %83 = vector.broadcast %cst_29 : f32 to vector<16x16xf32>
    %84 = arith.minimumf %83, %82 : vector<16x16xf32>
    %cst_30 = arith.constant -1.000000e+04 : f32
    %85 = vector.broadcast %cst_30 : f32 to vector<16x16xf32>
    %86 = arith.select %6, %85, %84 : vector<16x16xi1>, vector<16x16xf32>
    %cst_31 = arith.constant dense<0xFF800000> : vector<16xf32>
    %87 = vector.multi_reduction <maximumf>, %86, %cst_31 [1] : vector<16x16xf32> to vector<16xf32>
    %88 = vector.shape_cast %87 : vector<16xf32> to vector<16x1xf32>
    %89 = vector.broadcast %88 : vector<16x1xf32> to vector<16x16xf32>
    %90 = arith.subf %86, %89 : vector<16x16xf32>
    %91 = math.exp %90 : vector<16x16xf32>
    %cst_32 = arith.constant dense<0.000000e+00> : vector<16xf32>
    %92 = vector.multi_reduction <add>, %91, %cst_32 [1] : vector<16x16xf32> to vector<16xf32>
    %93 = vector.shape_cast %92 : vector<16xf32> to vector<16x1xf32>
    %94 = tpu.reciprocal %93 {approx = true} : vector<16x1xf32> -> vector<16x1xf32>
    %95 = vector.broadcast %94 : vector<16x1xf32> to vector<16x16xf32>
    %96 = arith.mulf %91, %95 : vector<16x16xf32>
    %97 = arith.mulf %93, %94 : vector<16x1xf32>
    %cst_33 = arith.constant 1.600000e-05 : f32
    %98 = vector.broadcast %cst_33 : f32 to vector<16x1xf32>
    %99 = arith.addf %97, %98 : vector<16x1xf32>
    %100 = tpu.reciprocal %99 {approx = true} : vector<16x1xf32> -> vector<16x1xf32>
    %cst_34 = arith.constant 9.99999997E-7 : f32
    %101 = vector.broadcast %cst_34 : f32 to vector<16x16xf32>
    %102 = arith.addf %96, %101 : vector<16x16xf32>
    %103 = vector.broadcast %100 : vector<16x1xf32> to vector<16x16xf32>
    %104 = arith.mulf %102, %103 : vector<16x16xf32>
    %cst_35 = arith.constant dense<0.000000e+00> : vector<16x32xf32>
    %105 = tpu.matmul %104, %79, %cst_35 {dimension_numbers = #tpu.dot_dimension_numbers<[1], [0], [0], [1], [0, 0, 1, 1], [], []>} : vector<16x16xf32>, vector<16x32xf32>, vector<16x32xf32> -> vector<16x32xf32>
    %106 = vector.extract_strided_slice %16 {offsets = [0, 96], sizes = [16, 32], strides = [1, 1]} : vector<16x128xf32> to vector<16x32xf32>
    %107 = vector.extract_strided_slice %17 {offsets = [0, 96], sizes = [16, 32], strides = [1, 1]} : vector<16x128xf32> to vector<16x32xf32>
    %108 = vector.extract_strided_slice %18 {offsets = [0, 96], sizes = [16, 32], strides = [1, 1]} : vector<16x128xf32> to vector<16x32xf32>
    %cst_36 = arith.constant dense<0.000000e+00> : vector<16x16xf32>
    %109 = tpu.matmul %106, %107, %cst_36 {dimension_numbers = #tpu.dot_dimension_numbers<[1], [1], [0], [0], [0, 0, 1, 0], [], []>} : vector<16x32xf32>, vector<16x32xf32>, vector<16x16xf32> -> vector<16x16xf32>
    %cst_37 = arith.constant -1.000000e+02 : f32
    %cst_38 = arith.constant 1.000000e+02 : f32
    %110 = vector.broadcast %cst_37 : f32 to vector<16x16xf32>
    %111 = arith.maximumf %110, %109 : vector<16x16xf32>
    %112 = vector.broadcast %cst_38 : f32 to vector<16x16xf32>
    %113 = arith.minimumf %112, %111 : vector<16x16xf32>
    %cst_39 = arith.constant -1.000000e+04 : f32
    %114 = vector.broadcast %cst_39 : f32 to vector<16x16xf32>
    %115 = arith.select %6, %114, %113 : vector<16x16xi1>, vector<16x16xf32>
    %cst_40 = arith.constant dense<0xFF800000> : vector<16xf32>
    %116 = vector.multi_reduction <maximumf>, %115, %cst_40 [1] : vector<16x16xf32> to vector<16xf32>
    %117 = vector.shape_cast %116 : vector<16xf32> to vector<16x1xf32>
    %118 = vector.broadcast %117 : vector<16x1xf32> to vector<16x16xf32>
    %119 = arith.subf %115, %118 : vector<16x16xf32>
    %120 = math.exp %119 : vector<16x16xf32>
    %cst_41 = arith.constant dense<0.000000e+00> : vector<16xf32>
    %121 = vector.multi_reduction <add>, %120, %cst_41 [1] : vector<16x16xf32> to vector<16xf32>
    %122 = vector.shape_cast %121 : vector<16xf32> to vector<16x1xf32>
    %123 = tpu.reciprocal %122 {approx = true} : vector<16x1xf32> -> vector<16x1xf32>
    %124 = vector.broadcast %123 : vector<16x1xf32> to vector<16x16xf32>
    %125 = arith.mulf %120, %124 : vector<16x16xf32>
    %126 = arith.mulf %122, %123 : vector<16x1xf32>
    %cst_42 = arith.constant 1.600000e-05 : f32
    %127 = vector.broadcast %cst_42 : f32 to vector<16x1xf32>
    %128 = arith.addf %126, %127 : vector<16x1xf32>
    %129 = tpu.reciprocal %128 {approx = true} : vector<16x1xf32> -> vector<16x1xf32>
    %cst_43 = arith.constant 9.99999997E-7 : f32
    %130 = vector.broadcast %cst_43 : f32 to vector<16x16xf32>
    %131 = arith.addf %125, %130 : vector<16x16xf32>
    %132 = vector.broadcast %129 : vector<16x1xf32> to vector<16x16xf32>
    %133 = arith.mulf %131, %132 : vector<16x16xf32>
    %cst_44 = arith.constant dense<0.000000e+00> : vector<16x32xf32>
    %134 = tpu.matmul %133, %108, %cst_44 {dimension_numbers = #tpu.dot_dimension_numbers<[1], [0], [0], [1], [0, 0, 1, 1], [], []>} : vector<16x16xf32>, vector<16x32xf32>, vector<16x32xf32> -> vector<16x32xf32>
    %135 = tpu.concatenate %47, %76, %105, %134 in 1 : vector<16x32xf32>, vector<16x32xf32>, vector<16x32xf32>, vector<16x32xf32> -> vector<16x128xf32>
    %c0_45 = arith.constant 0 : index
    %c0_46 = arith.constant 0 : index
    %c0_47 = arith.constant 0 : index
    %136 = vector.load %arg4[%c0_45, %c0_46, %c0_47] : memref<1x128x128xbf16, #tpu.memory_space<vmem>>, vector<1x128x128xbf16>
    %137 = vector.shape_cast %136 : vector<1x128x128xbf16> to vector<128x128xbf16>
    %cst_48 = arith.constant dense<0.000000e+00> : vector<16x128xf32>
    %138 = tpu.matmul %135, %137, %cst_48 {dimension_numbers = #tpu.dot_dimension_numbers<[1], [0], [0], [1], [0, 0, 1, 1], [], []>} : vector<16x128xf32>, vector<128x128xbf16>, vector<16x128xf32> -> vector<16x128xf32>
    %c0_49 = arith.constant 0 : index
    %c0_50 = arith.constant 0 : index
    %c0_51 = arith.constant 0 : index
    %139 = vector.load %arg8[%c0_49, %c0_50, %c0_51] : memref<1x1x128xf32, #tpu.memory_space<vmem>>, vector<1x1x128xf32>
    %140 = vector.shape_cast %139 : vector<1x1x128xf32> to vector<1x128xf32>
    %141 = vector.broadcast %140 : vector<1x128xf32> to vector<16x128xf32>
    %142 = arith.addf %138, %141 : vector<16x128xf32>
    %c0_52 = arith.constant 0 : index
    %c0_53 = arith.constant 0 : index
    %c0_54 = arith.constant 0 : index
    %143 = vector.load %arg9[%c0_52, %c0_53, %c0_54] : memref<1x1x128xf32, #tpu.memory_space<vmem>>, vector<1x1x128xf32>
    %144 = vector.shape_cast %143 : vector<1x1x128xf32> to vector<1x128xf32>
    %c0_55 = arith.constant 0 : index
    %c0_56 = arith.constant 0 : index
    %c0_57 = arith.constant 0 : index
    %145 = vector.load %arg10[%c0_55, %c0_56, %c0_57] : memref<1x1x128xf32, #tpu.memory_space<vmem>>, vector<1x1x128xf32>
    %146 = vector.shape_cast %145 : vector<1x1x128xf32> to vector<1x128xf32>
    %cst_58 = arith.constant dense<0.000000e+00> : vector<16xf32>
    %147 = vector.multi_reduction <add>, %142, %cst_58 [1] : vector<16x128xf32> to vector<16xf32>
    %148 = vector.shape_cast %147 : vector<16xf32> to vector<16x1xf32>
    %cst_59 = arith.constant 1.280000e+02 : f32
    %149 = vector.broadcast %cst_59 : f32 to vector<16x1xf32>
    %150 = arith.divf %148, %149 : vector<16x1xf32>
    %151 = vector.broadcast %150 : vector<16x1xf32> to vector<16x128xf32>
    %152 = arith.subf %142, %151 : vector<16x128xf32>
    %153 = arith.mulf %152, %152 : vector<16x128xf32>
    %cst_60 = arith.constant dense<0.000000e+00> : vector<16xf32>
    %154 = vector.multi_reduction <add>, %153, %cst_60 [1] : vector<16x128xf32> to vector<16xf32>
    %155 = vector.shape_cast %154 : vector<16xf32> to vector<16x1xf32>
    %cst_61 = arith.constant 1.280000e+02 : f32
    %156 = vector.broadcast %cst_61 : f32 to vector<16x1xf32>
    %157 = arith.divf %155, %156 : vector<16x1xf32>
    %158 = vector.broadcast %150 : vector<16x1xf32> to vector<16x128xf32>
    %159 = arith.subf %142, %158 : vector<16x128xf32>
    %cst_62 = arith.constant 9.99999974E-6 : f32
    %160 = vector.broadcast %cst_62 : f32 to vector<16x1xf32>
    %161 = arith.addf %157, %160 : vector<16x1xf32>
    %162 = math.rsqrt %161 : vector<16x1xf32>
    %163 = vector.broadcast %162 : vector<16x1xf32> to vector<16x128xf32>
    %164 = arith.mulf %159, %163 : vector<16x128xf32>
    %165 = vector.broadcast %144 : vector<1x128xf32> to vector<16x128xf32>
    %166 = arith.mulf %164, %165 : vector<16x128xf32>
    %167 = vector.broadcast %146 : vector<1x128xf32> to vector<16x128xf32>
    %168 = arith.addf %166, %167 : vector<16x128xf32>
    %169 = arith.addf %3, %168 : vector<16x128xf32>
    %c0_63 = arith.constant 0 : index
    %c0_64 = arith.constant 0 : index
    %c0_65 = arith.constant 0 : index
    %170 = vector.load %arg5[%c0_63, %c0_64, %c0_65] : memref<1x128x256xbf16, #tpu.memory_space<vmem>>, vector<1x128x256xbf16>
    %171 = vector.shape_cast %170 : vector<1x128x256xbf16> to vector<128x256xbf16>
    %cst_66 = arith.constant dense<0.000000e+00> : vector<16x256xf32>
    %172 = tpu.matmul %169, %171, %cst_66 {dimension_numbers = #tpu.dot_dimension_numbers<[1], [0], [0], [1], [0, 0, 1, 1], [], []>} : vector<16x128xf32>, vector<128x256xbf16>, vector<16x256xf32> -> vector<16x256xf32>
    %c0_67 = arith.constant 0 : index
    %c0_68 = arith.constant 0 : index
    %c0_69 = arith.constant 0 : index
    %173 = vector.load %arg11[%c0_67, %c0_68, %c0_69] : memref<1x1x256xf32, #tpu.memory_space<vmem>>, vector<1x1x256xf32>
    %174 = vector.shape_cast %173 : vector<1x1x256xf32> to vector<1x256xf32>
    %175 = vector.broadcast %174 : vector<1x256xf32> to vector<16x256xf32>
    %176 = arith.addf %172, %175 : vector<16x256xf32>
    %cst_70 = arith.constant 5.000000e-01 : f32
    %177 = vector.broadcast %cst_70 : f32 to vector<16x256xf32>
    %178 = arith.mulf %177, %176 : vector<16x256xf32>
    %cst_71 = arith.constant 4.471500e-02 : f32
    %179 = vector.broadcast %cst_71 : f32 to vector<16x256xf32>
    %180 = arith.mulf %179, %176 : vector<16x256xf32>
    %181 = arith.mulf %180, %176 : vector<16x256xf32>
    %182 = arith.mulf %181, %176 : vector<16x256xf32>
    %183 = arith.addf %176, %182 : vector<16x256xf32>
    %cst_72 = arith.constant 0.797884583 : f32
    %184 = vector.broadcast %cst_72 : f32 to vector<16x256xf32>
    %185 = arith.mulf %184, %183 : vector<16x256xf32>
    %186 = math.tanh %185 : vector<16x256xf32>
    %cst_73 = arith.constant 1.000000e+00 : f32
    %187 = vector.broadcast %cst_73 : f32 to vector<16x256xf32>
    %188 = arith.addf %187, %186 : vector<16x256xf32>
    %189 = arith.mulf %178, %188 : vector<16x256xf32>
    %c0_74 = arith.constant 0 : index
    %c0_75 = arith.constant 0 : index
    %c0_76 = arith.constant 0 : index
    %190 = vector.load %arg6[%c0_74, %c0_75, %c0_76] : memref<1x256x128xbf16, #tpu.memory_space<vmem>>, vector<1x256x128xbf16>
    %191 = vector.shape_cast %190 : vector<1x256x128xbf16> to vector<256x128xbf16>
    %cst_77 = arith.constant dense<0.000000e+00> : vector<16x128xf32>
    %192 = tpu.matmul %189, %191, %cst_77 {dimension_numbers = #tpu.dot_dimension_numbers<[1], [0], [0], [1], [0, 0, 1, 1], [], []>} : vector<16x256xf32>, vector<256x128xbf16>, vector<16x128xf32> -> vector<16x128xf32>
    %c0_78 = arith.constant 0 : index
    %c0_79 = arith.constant 0 : index
    %c0_80 = arith.constant 0 : index
    %193 = vector.load %arg12[%c0_78, %c0_79, %c0_80] : memref<1x1x128xf32, #tpu.memory_space<vmem>>, vector<1x1x128xf32>
    %194 = vector.shape_cast %193 : vector<1x1x128xf32> to vector<1x128xf32>
    %195 = vector.broadcast %194 : vector<1x128xf32> to vector<16x128xf32>
    %196 = arith.addf %192, %195 : vector<16x128xf32>
    %c0_81 = arith.constant 0 : index
    %c0_82 = arith.constant 0 : index
    %c0_83 = arith.constant 0 : index
    %197 = vector.load %arg13[%c0_81, %c0_82, %c0_83] : memref<1x1x128xf32, #tpu.memory_space<vmem>>, vector<1x1x128xf32>
    %198 = vector.shape_cast %197 : vector<1x1x128xf32> to vector<1x128xf32>
    %c0_84 = arith.constant 0 : index
    %c0_85 = arith.constant 0 : index
    %c0_86 = arith.constant 0 : index
    %199 = vector.load %arg14[%c0_84, %c0_85, %c0_86] : memref<1x1x128xf32, #tpu.memory_space<vmem>>, vector<1x1x128xf32>
    %200 = vector.shape_cast %199 : vector<1x1x128xf32> to vector<1x128xf32>
    %cst_87 = arith.constant dense<0.000000e+00> : vector<16xf32>
    %201 = vector.multi_reduction <add>, %196, %cst_87 [1] : vector<16x128xf32> to vector<16xf32>
    %202 = vector.shape_cast %201 : vector<16xf32> to vector<16x1xf32>
    %cst_88 = arith.constant 1.280000e+02 : f32
    %203 = vector.broadcast %cst_88 : f32 to vector<16x1xf32>
    %204 = arith.divf %202, %203 : vector<16x1xf32>
    %205 = vector.broadcast %204 : vector<16x1xf32> to vector<16x128xf32>
    %206 = arith.subf %196, %205 : vector<16x128xf32>
    %207 = arith.mulf %206, %206 : vector<16x128xf32>
    %cst_89 = arith.constant dense<0.000000e+00> : vector<16xf32>
    %208 = vector.multi_reduction <add>, %207, %cst_89 [1] : vector<16x128xf32> to vector<16xf32>
    %209 = vector.shape_cast %208 : vector<16xf32> to vector<16x1xf32>
    %cst_90 = arith.constant 1.280000e+02 : f32
    %210 = vector.broadcast %cst_90 : f32 to vector<16x1xf32>
    %211 = arith.divf %209, %210 : vector<16x1xf32>
    %212 = vector.broadcast %204 : vector<16x1xf32> to vector<16x128xf32>
    %213 = arith.subf %196, %212 : vector<16x128xf32>
    %cst_91 = arith.constant 9.99999974E-6 : f32
    %214 = vector.broadcast %cst_91 : f32 to vector<16x1xf32>
    %215 = arith.addf %211, %214 : vector<16x1xf32>
    %216 = math.rsqrt %215 : vector<16x1xf32>
    %217 = vector.broadcast %216 : vector<16x1xf32> to vector<16x128xf32>
    %218 = arith.mulf %213, %217 : vector<16x128xf32>
    %219 = vector.broadcast %198 : vector<1x128xf32> to vector<16x128xf32>
    %220 = arith.mulf %218, %219 : vector<16x128xf32>
    %221 = vector.broadcast %200 : vector<1x128xf32> to vector<16x128xf32>
    %222 = arith.addf %220, %221 : vector<16x128xf32>
    %223 = arith.addf %169, %222 : vector<16x128xf32>
    %c0_92 = arith.constant 0 : index
    %c0_93 = arith.constant 0 : index
    %224 = vector.load %arg16[%c0_92, %c0_93] : memref<16x128xf32, #tpu.memory_space<vmem>>, vector<16x128xf32>
    tpu.vector_store %arg16[%c0_92, %c0_93], %223 {strides = array<i32>} : memref<16x128xf32, #tpu.memory_space<vmem>>, vector<16x128xf32>,
    %c1_i32 = arith.constant 1 : i32
    %225 = arith.cmpi eq, %arg1, %c1_i32 : i32
    %226 = arith.extui %225 : i1 to i32
    %c0_i32_94 = arith.constant 0 : i32
    %227 = arith.cmpi ne, %226, %c0_i32_94 : i32
    scf.if %227 {
      %c0_95 = arith.constant 0 : index
      %c0_96 = arith.constant 0 : index
      %228 = vector.load %arg16[%c0_95, %c0_96] : memref<16x128xf32, #tpu.memory_space<vmem>>, vector<16x128xf32>
      %c0_97 = arith.constant 0 : index
      %c0_98 = arith.constant 0 : index
      %c0_99 = arith.constant 0 : index
      %229 = vector.load %arg15[%c0_97, %c0_98, %c0_99] : memref<1x16x128xf32, #tpu.memory_space<vmem>>, vector<1x16x128xf32>
      %230 = vector.shape_cast %229 : vector<1x16x128xf32> to vector<16x128xf32>
      %231 = vector.shape_cast %228 : vector<16x128xf32> to vector<1x16x128xf32>
      tpu.vector_store %arg15[%c0_97, %c0_98, %c0_99], %231 {strides = array<i32>} : memref<1x16x128xf32, #tpu.memory_space<vmem>>, vector<1x16x128xf32>,
    } else {
    }
    return
  }
  func.func @transform_0(%arg0: i32, %arg1: i32) -> (i32, i32, i32) {
    %c0_i32 = arith.constant 0 : i32
    %c0_i32_0 = arith.constant 0 : i32
    %c0_i32_1 = arith.constant 0 : i32
    return %arg0, %c0_i32, %c0_i32_0 : i32, i32, i32
  }
  func.func @transform_1(%arg0: i32, %arg1: i32) -> (i32, i32, i32) {
    %c0_i32 = arith.constant 0 : i32
    %c0_i32_0 = arith.constant 0 : i32
    %c0_i32_1 = arith.constant 0 : i32
    return %arg1, %c0_i32, %c0_i32_0 : i32, i32, i32
  }
  func.func @transform_2(%arg0: i32, %arg1: i32) -> (i32, i32, i32) {
    %c0_i32 = arith.constant 0 : i32
    %c0_i32_0 = arith.constant 0 : i32
    %c0_i32_1 = arith.constant 0 : i32
    return %arg1, %c0_i32, %c0_i32_0 : i32, i32, i32
  }
  func.func @transform_3(%arg0: i32, %arg1: i32) -> (i32, i32, i32) {
    %c0_i32 = arith.constant 0 : i32
    %c0_i32_0 = arith.constant 0 : i32
    %c0_i32_1 = arith.constant 0 : i32
    return %arg1, %c0_i32, %c0_i32_0 : i32, i32, i32
  }
  func.func @transform_4(%arg0: i32, %arg1: i32) -> (i32, i32, i32) {
    %c0_i32 = arith.constant 0 : i32
    %c0_i32_0 = arith.constant 0 : i32
    %c0_i32_1 = arith.constant 0 : i32
    return %arg1, %c0_i32, %c0_i32_0 : i32, i32, i32
  }
  func.func @transform_5(%arg0: i32, %arg1: i32) -> (i32, i32, i32) {
    %c0_i32 = arith.constant 0 : i32
    %c0_i32_0 = arith.constant 0 : i32
    %c0_i32_1 = arith.constant 0 : i32
    return %arg1, %c0_i32, %c0_i32_0 : i32, i32, i32
  }
  func.func @transform_6(%arg0: i32, %arg1: i32) -> (i32, i32, i32) {
    %c0_i32 = arith.constant 0 : i32
    %c0_i32_0 = arith.constant 0 : i32
    %c0_i32_1 = arith.constant 0 : i32
    return %arg1, %c0_i32, %c0_i32_0 : i32, i32, i32
  }
  func.func @transform_7(%arg0: i32, %arg1: i32) -> (i32, i32, i32) {
    %c0_i32 = arith.constant 0 : i32
    %c0_i32_0 = arith.constant 0 : i32
    %c0_i32_1 = arith.constant 0 : i32
    return %arg1, %c0_i32, %c0_i32_0 : i32, i32, i32
  }
  func.func @transform_8(%arg0: i32, %arg1: i32) -> (i32, i32, i32) {
    %c0_i32 = arith.constant 0 : i32
    %c0_i32_0 = arith.constant 0 : i32
    %c0_i32_1 = arith.constant 0 : i32
    return %arg1, %c0_i32, %c0_i32_0 : i32, i32, i32
  }
  func.func @transform_9(%arg0: i32, %arg1: i32) -> (i32, i32, i32) {
    %c0_i32 = arith.constant 0 : i32
    %c0_i32_0 = arith.constant 0 : i32
    %c0_i32_1 = arith.constant 0 : i32
    return %arg1, %c0_i32, %c0_i32_0 : i32, i32, i32
  }
  func.func @transform_10(%arg0: i32, %arg1: i32) -> (i32, i32, i32) {
    %c0_i32 = arith.constant 0 : i32
    %c0_i32_0 = arith.constant 0 : i32
    %c0_i32_1 = arith.constant 0 : i32
    return %arg1, %c0_i32, %c0_i32_0 : i32, i32, i32
  }
  func.func @transform_11(%arg0: i32, %arg1: i32) -> (i32, i32, i32) {
    %c0_i32 = arith.constant 0 : i32
    %c0_i32_0 = arith.constant 0 : i32
    %c0_i32_1 = arith.constant 0 : i32
    return %arg1, %c0_i32, %c0_i32_0 : i32, i32, i32
  }
  func.func @transform_12(%arg0: i32, %arg1: i32) -> (i32, i32, i32) {
    %c0_i32 = arith.constant 0 : i32
    %c0_i32_0 = arith.constant 0 : i32
    %c0_i32_1 = arith.constant 0 : i32
    return %arg1, %c0_i32, %c0_i32_0 : i32, i32, i32
  }
  func.func @transform_13(%arg0: i32, %arg1: i32) -> (i32, i32, i32) {
    %c0_i32 = arith.constant 0 : i32
    %c0_i32_0 = arith.constant 0 : i32
    %c0_i32_1 = arith.constant 0 : i32
    return %arg0, %c0_i32, %c0_i32_0 : i32, i32, i32
  }
}

</mosaic_0001>

<llo_original>
// kernel: tpu_custom_call.1
$region0: #{tpu_custom_call.1}
  #allocation0 [shape = 'u32[]', space=smem, size = 0x4, offset = 0x4, fixed_abs, tag = 'smem constant byte address 0x4 - core index']
  #allocation1 [shape = 'u32[144,128]{1,0:T(1,128)}', space=vmem, size = 0x12000, scoped, tag = 'internal scratch']
  #allocation2 [shape = 'f32[16,128]{1,0:T(8,128)}', space=vmem, size = 0x2000, scoped, tag = 'scratch operand']
  %s0 = inlined_call_operand.hbm [shape: f32[2,16,128], index: 0, kind: input, shape index: {}]
  %s1 = inlined_call_operand.hbm [shape: bf16[2,128,384], index: 1, kind: input, shape index: {}]
  %s2 = inlined_call_operand.hbm [shape: bf16[2,128,128], index: 2, kind: input, shape index: {}]
  %s3 = inlined_call_operand.hbm [shape: bf16[2,128,256], index: 3, kind: input, shape index: {}]
  %s4 = inlined_call_operand.hbm [shape: bf16[2,256,128], index: 4, kind: input, shape index: {}]
  %s5 = inlined_call_operand.vmem [shape: f32[2,1,384], index: 5, kind: input, shape index: {}]
  %s6 = inlined_call_operand.hbm [shape: f32[2,1,128], index: 6, kind: input, shape index: {}]
  %s7 = inlined_call_operand.vmem [shape: f32[2,1,128], index: 7, kind: input, shape index: {}]
  %s8 = inlined_call_operand.vmem [shape: f32[2,1,128], index: 8, kind: input, shape index: {}]
  %s9 = inlined_call_operand.vmem [shape: f32[2,1,256], index: 9, kind: input, shape index: {}]
  %s10 = inlined_call_operand.vmem [shape: f32[2,1,128], index: 10, kind: input, shape index: {}]
  %s11 = inlined_call_operand.vmem [shape: f32[2,1,128], index: 11, kind: input, shape index: {}]
  %s12 = inlined_call_operand.vmem [shape: f32[2,1,128], index: 12, kind: input, shape index: {}]
  %s13 = inlined_call_operand.hbm [shape: f32[2,16,128], index: 13, kind: output, shape index: {}]
  %s14 = sld [smem:[#allocation0]]
  $region117: #{tpu_custom_call.1} parent=0
    _
  %s16 = ssub.s32 1, %s14
  %s17 = scalar_select 0, %s16, %s14
  $region1: #{tpu_custom_call.1} parent=0
    #allocation3 [shape = 'u8[16384]{0}', space=vmem, size = 0x4000, scoped, tag = 'input window, operand 0']
    #allocation4 [shape = 's32[2]{0}', space=sflag, size = 0x8, scoped, tag = 'scoped memory for tpu_custom_call.1']
    #allocation5 [shape = 's32[2]{0}', space=sflag, size = 0x8, scoped, tag = 'scoped memory for tpu_custom_call.1']
    #allocation6 [shape = 'u8[196608]{0}', space=vmem, size = 0x30000, scoped, tag = 'input window, operand 1']
    #allocation7 [shape = 's32[2]{0}', space=sflag, size = 0x8, scoped, tag = 'scoped memory for tpu_custom_call.1']
    #allocation8 [shape = 'u8[65536]{0}', space=vmem, size = 0x10000, scoped, tag = 'input window, operand 2']
    #allocation9 [shape = 'u8[131072]{0}', space=vmem, size = 0x20000, scoped, tag = 'input window, operand 3']
    #allocation10 [shape = 's32[2]{0}', space=sflag, size = 0x8, scoped, tag = 'scoped memory for tpu_custom_call.1']
    #allocation11 [shape = 'u8[131072]{0}', space=vmem, size = 0x20000, scoped, tag = 'input window, operand 4']
    #allocation12 [shape = 'u8[1024]{0}', space=vmem, size = 0x400, scoped, tag = 'input window, operand 6']
    #allocation13 [shape = 's32[2]{0}', space=sflag, size = 0x8, scoped, tag = 'scoped memory for tpu_custom_call.1']
    #allocation14 [shape = 'u8[16384]{0}', space=vmem, size = 0x4000, scoped, tag = 'output window, operand 0']
    %18 = vsyncpa [#allocation4], 0
    %s19 = scalar_lea.sflag [#allocation4], 1
    %20 = vsyncpa %s19, 0
    %21 = vsyncpa [#allocation7], 0
    %s22 = scalar_lea.sflag [#allocation7], 1
    %23 = vsyncpa %s22, 0
    %24 = vsyncpa [#allocation10], 0
    %s25 = scalar_lea.sflag [#allocation10], 1
    %26 = vsyncpa %s25, 0
    %27 = vsyncpa [#allocation13], 0
    %s28 = scalar_lea.sflag [#allocation13], 1
    %29 = vsyncpa %s28, 0
    %30 = vsyncpa [#allocation5], 0
    %s31 = scalar_lea.sflag [#allocation5], 1
    %32 = vsyncpa %s31, 0
    loop: start=0, step=1, limit=6
    $region2: #{tpu_custom_call.1} parent=1 // loop_pre_header
      _
    $region3: #{tpu_custom_call.1} parent=1 // loop_header
      %s34 = sphi 0, %s38
      %p35 = scmp.ge.s32.totalorder %s34, 6
      %s41 = sphi 0, %s53
      %s42 = sphi 0, %s49
      %s43 = sphi 0, %s41
      %s44 = sphi 0, %s42
      %s45 = sphi 0, %s43
      %s46 = sphi 0, %s44
      %s56 = sphi 0, %s58
      %s59 = sphi 0, %s56
      %s60 = sphi 0, %s59
      %s76 = sphi 0, %s60
      %s82 = sphi 0, %s84
      %s85 = sphi 0, %s82
      %s86 = sphi 0, %s85
      %s102 = sphi 0, %s86
      %s108 = sphi 0, %s110
      %s111 = sphi 0, %s108
      %s112 = sphi 0, %s111
      %s128 = sphi 0, %s112
      %s134 = sphi 0, %s136
      %s137 = sphi 0, %s134
      %s138 = sphi 0, %s137
      %s154 = sphi 0, %s138
      %s160 = sphi 0, %s162
      %s163 = sphi 0, %s160
      %s164 = sphi 0, %s163
      %s180 = sphi 0, %s164
      %s186 = sphi 0, %s188
      %s189 = sphi 0, %s186
      %s190 = sphi 0, %s189
      %s206 = sphi 0, %s190
      %s212 = sphi 0, %s214
      %s215 = sphi 0, %s212
      %s216 = sphi 0, %s215
      %s232 = sphi 0, %s216
      %s238 = sphi 0, %s240
      %s241 = sphi 0, %s238
      %s242 = sphi 0, %s241
      %s258 = sphi 0, %s242
      %s264 = sphi 0, %s266
      %s267 = sphi 0, %s264
      %s268 = sphi 0, %s267
      %s284 = sphi 0, %s268
      %s290 = sphi 0, %s292
      %s293 = sphi 0, %s290
      %s294 = sphi 0, %s293
      %s310 = sphi 0, %s294
      %s316 = sphi 0, %s318
      %s319 = sphi 0, %s316
      %s320 = sphi 0, %s319
      %s336 = sphi 0, %s320
      %s342 = sphi 0, %s344
      %s345 = sphi 0, %s342
      %s346 = sphi 0, %s345
      %s362 = sphi 0, %s346
      %s368 = sphi 0, %s370
      %s371 = sphi 0, %s368
      %s372 = sphi 0, %s371
      %s388 = sphi 0, %s372
      %s394 = sphi 0, %s396
      %s397 = sphi 0, %s394
      %s398 = sphi 0, %s397
      %s414 = sphi 0, %s398
    $region4: #{tpu_custom_call.1} parent=1 // loop_header_branch
      %37 = sbr.rel (%p35) target = $region8
    $region5: #{tpu_custom_call.1} parent=1 // loop_body
      %s39 = ssub.s32 %s34, 1
      %s40 = ssub.s32 %s34, 2
      %s47 = sadd.s32 1, %s42
      %p48 = scmp.ge.s32.totalorder %s47, 2
      %s49 = scalar_select %p48, 0, %s47
      %s50 = sadd.s32 1, %s41
      %s51 = scalar_select %p48, %s50, %s41
      %p52 = scmp.ge.s32.totalorder %s51, 2
      %s53 = scalar_select %p52, 0, %s51
      %s54 = ssub.s32 %s41, %s53
      %p55 = scmp.eq.s32.totalorder %s54, 0
      %s57 = sadd.s32 %s56, 1
      %s58 = scalar_select %p55, %s56, %s57
      %p61 = pneg %p55
      %p62 = scmp.eq.s32.totalorder %s34, 3
      %p63 = por %p61, %p62
      %p64 = scmp.ne.s32.totalorder %s56, %s59
      %p65 = scmp.eq.s32.totalorder %s34, 0
      %p66 = por %p64, %p65
      %p67 = scmp.ne.s32.totalorder %s56, %s59
      %p68 = scmp.eq.s32.totalorder %s39, 3
      %p69 = por %p67, %p68
      %p70 = scmp.ne.s32.totalorder %s59, %s60
      %p71 = scmp.eq.s32.totalorder %s39, 0
      %p72 = por %p70, %p71
      %p73 = scmp.ne.s32.totalorder %s59, %s60
      %p74 = scmp.eq.s32.totalorder %s40, 3
      %p75 = por %p73, %p74
      %p77 = scmp.ne.s32.totalorder %s60, %s76
      %p78 = scmp.eq.s32.totalorder %s40, 0
      %p79 = por %p77, %p78
      %s80 = ssub.s32 %s42, %s49
      %p81 = scmp.eq.s32.totalorder %s80, 0
      %s83 = sadd.s32 %s82, 1
      %s84 = scalar_select %p81, %s82, %s83
      %p87 = pneg %p81
      %p88 = scmp.eq.s32.totalorder %s34, 3
      %p89 = por %p87, %p88
      %p90 = scmp.ne.s32.totalorder %s82, %s85
      %p91 = scmp.eq.s32.totalorder %s34, 0
      %p92 = por %p90, %p91
      %p93 = scmp.ne.s32.totalorder %s82, %s85
      %p94 = scmp.eq.s32.totalorder %s39, 3
      %p95 = por %p93, %p94
      %p96 = scmp.ne.s32.totalorder %s85, %s86
      %p97 = scmp.eq.s32.totalorder %s39, 0
      %p98 = por %p96, %p97
      %p99 = scmp.ne.s32.totalorder %s85, %s86
      %p100 = scmp.eq.s32.totalorder %s40, 3
      %p101 = por %p99, %p100
      %p103 = scmp.ne.s32.totalorder %s86, %s102
      %p104 = scmp.eq.s32.totalorder %s40, 0
      %p105 = por %p103, %p104
      %s106 = ssub.s32 %s42, %s49
      %p107 = scmp.eq.s32.totalorder %s106, 0
      %s109 = sadd.s32 %s108, 1
      %s110 = scalar_select %p107, %s108, %s109
      %p113 = pneg %p107
      %p114 = scmp.eq.s32.totalorder %s34, 3
      %p115 = por %p113, %p114
      %p116 = scmp.ne.s32.totalorder %s108, %s111
      %p117 = scmp.eq.s32.totalorder %s34, 0
      %p118 = por %p116, %p117
      %p119 = scmp.ne.s32.totalorder %s108, %s111
      %p120 = scmp.eq.s32.totalorder %s39, 3
      %p121 = por %p119, %p120
      %p122 = scmp.ne.s32.totalorder %s111, %s112
      %p123 = scmp.eq.s32.totalorder %s39, 0
      %p124 = por %p122, %p123
      %p125 = scmp.ne.s32.totalorder %s111, %s112
      %p126 = scmp.eq.s32.totalorder %s40, 3
      %p127 = por %p125, %p126
      %p129 = scmp.ne.s32.totalorder %s112, %s128
      %p130 = scmp.eq.s32.totalorder %s40, 0
      %p131 = por %p129, %p130
      %s132 = ssub.s32 %s42, %s49
      %p133 = scmp.eq.s32.totalorder %s132, 0
      %s135 = sadd.s32 %s134, 1
      %s136 = scalar_select %p133, %s134, %s135
      %p139 = pneg %p133
      %p140 = scmp.eq.s32.totalorder %s34, 3
      %p141 = por %p139, %p140
      %p142 = scmp.ne.s32.totalorder %s134, %s137
      %p143 = scmp.eq.s32.totalorder %s34, 0
      %p144 = por %p142, %p143
      %p145 = scmp.ne.s32.totalorder %s134, %s137
      %p146 = scmp.eq.s32.totalorder %s39, 3
      %p147 = por %p145, %p146
      %p148 = scmp.ne.s32.totalorder %s137, %s138
      %p149 = scmp.eq.s32.totalorder %s39, 0
      %p150 = por %p148, %p149
      %p151 = scmp.ne.s32.totalorder %s137, %s138
      %p152 = scmp.eq.s32.totalorder %s40, 3
      %p153 = por %p151, %p152
      %p155 = scmp.ne.s32.totalorder %s138, %s154
      %p156 = scmp.eq.s32.totalorder %s40, 0
      %p157 = por %p155, %p156
      %s158 = ssub.s32 %s42, %s49
      %p159 = scmp.eq.s32.totalorder %s158, 0
      %s161 = sadd.s32 %s160, 1
      %s162 = scalar_select %p159, %s160, %s161
      %p165 = pneg %p159
      %p166 = scmp.eq.s32.totalorder %s34, 3
      %p167 = por %p165, %p166
      %p168 = scmp.ne.s32.totalorder %s160, %s163
      %p169 = scmp.eq.s32.totalorder %s34, 0
      %p170 = por %p168, %p169
      %p171 = scmp.ne.s32.totalorder %s160, %s163
      %p172 = scmp.eq.s32.totalorder %s39, 3
      %p173 = por %p171, %p172
      %p174 = scmp.ne.s32.totalorder %s163, %s164
      %p175 = scmp.eq.s32.totalorder %s39, 0
      %p176 = por %p174, %p175
      %p177 = scmp.ne.s32.totalorder %s163, %s164
      %p178 = scmp.eq.s32.totalorder %s40, 3
      %p179 = por %p177, %p178
      %p181 = scmp.ne.s32.totalorder %s164, %s180
      %p182 = scmp.eq.s32.totalorder %s40, 0
      %p183 = por %p181, %p182
      %s184 = ssub.s32 %s42, %s49
      %p185 = scmp.eq.s32.totalorder %s184, 0
      %s187 = sadd.s32 %s186, 1
      %s188 = scalar_select %p185, %s186, %s187
      %p191 = pneg %p185
      %p192 = scmp.eq.s32.totalorder %s34, 3
      %p193 = por %p191, %p192
      %p194 = scmp.ne.s32.totalorder %s186, %s189
      %p195 = scmp.eq.s32.totalorder %s34, 0
      %p196 = por %p194, %p195
      %p197 = scmp.ne.s32.totalorder %s186, %s189
      %p198 = scmp.eq.s32.totalorder %s39, 3
      %p199 = por %p197, %p198
      %p200 = scmp.ne.s32.totalorder %s189, %s190
      %p201 = scmp.eq.s32.totalorder %s39, 0
      %p202 = por %p200, %p201
      %p203 = scmp.ne.s32.totalorder %s189, %s190
      %p204 = scmp.eq.s32.totalorder %s40, 3
      %p205 = por %p203, %p204
      %p207 = scmp.ne.s32.totalorder %s190, %s206
      %p208 = scmp.eq.s32.totalorder %s40, 0
      %p209 = por %p207, %p208
      %s210 = ssub.s32 %s42, %s49
      %p211 = scmp.eq.s32.totalorder %s210, 0
      %s213 = sadd.s32 %s212, 1
      %s214 = scalar_select %p211, %s212, %s213
      %p217 = pneg %p211
      %p218 = scmp.eq.s32.totalorder %s34, 3
      %p219 = por %p217, %p218
      %p220 = scmp.ne.s32.totalorder %s212, %s215
      %p221 = scmp.eq.s32.totalorder %s34, 0
      %p222 = por %p220, %p221
      %p223 = scmp.ne.s32.totalorder %s212, %s215
      %p224 = scmp.eq.s32.totalorder %s39, 3
      %p225 = por %p223, %p224
      %p226 = scmp.ne.s32.totalorder %s215, %s216
      %p227 = scmp.eq.s32.totalorder %s39, 0
      %p228 = por %p226, %p227
      %p229 = scmp.ne.s32.totalorder %s215, %s216
      %p230 = scmp.eq.s32.totalorder %s40, 3
      %p231 = por %p229, %p230
      %p233 = scmp.ne.s32.totalorder %s216, %s232
      %p234 = scmp.eq.s32.totalorder %s40, 0
      %p235 = por %p233, %p234
      %s236 = ssub.s32 %s42, %s49
      %p237 = scmp.eq.s32.totalorder %s236, 0
      %s239 = sadd.s32 %s238, 1
      %s240 = scalar_select %p237, %s238, %s239
      %p243 = pneg %p237
      %p244 = scmp.eq.s32.totalorder %s34, 3
      %p245 = por %p243, %p244
      %p246 = scmp.ne.s32.totalorder %s238, %s241
      %p247 = scmp.eq.s32.totalorder %s34, 0
      %p248 = por %p246, %p247
      %p249 = scmp.ne.s32.totalorder %s238, %s241
      %p250 = scmp.eq.s32.totalorder %s39, 3
      %p251 = por %p249, %p250
      %p252 = scmp.ne.s32.totalorder %s241, %s242
      %p253 = scmp.eq.s32.totalorder %s39, 0
      %p254 = por %p252, %p253
      %p255 = scmp.ne.s32.totalorder %s241, %s242
      %p256 = scmp.eq.s32.totalorder %s40, 3
      %p257 = por %p255, %p256
      %p259 = scmp.ne.s32.totalorder %s242, %s258
      %p260 = scmp.eq.s32.totalorder %s40, 0
      %p261 = por %p259, %p260
      %s262 = ssub.s32 %s42, %s49
      %p263 = scmp.eq.s32.totalorder %s262, 0
      %s265 = sadd.s32 %s264, 1
      %s266 = scalar_select %p263, %s264, %s265
      %p269 = pneg %p263
      %p270 = scmp.eq.s32.totalorder %s34, 3
      %p271 = por %p269, %p270
      %p272 = scmp.ne.s32.totalorder %s264, %s267
      %p273 = scmp.eq.s32.totalorder %s34, 0
      %p274 = por %p272, %p273
      %p275 = scmp.ne.s32.totalorder %s264, %s267
      %p276 = scmp.eq.s32.totalorder %s39, 3
      %p277 = por %p275, %p276
      %p278 = scmp.ne.s32.totalorder %s267, %s268
      %p279 = scmp.eq.s32.totalorder %s39, 0
      %p280 = por %p278, %p279
      %p281 = scmp.ne.s32.totalorder %s267, %s268
      %p282 = scmp.eq.s32.totalorder %s40, 3
      %p283 = por %p281, %p282
      %p285 = scmp.ne.s32.totalorder %s268, %s284
      %p286 = scmp.eq.s32.totalorder %s40, 0
      %p287 = por %p285, %p286
      %s288 = ssub.s32 %s42, %s49
      %p289 = scmp.eq.s32.totalorder %s288, 0
      %s291 = sadd.s32 %s290, 1
      %s292 = scalar_select %p289, %s290, %s291
      %p295 = pneg %p289
      %p296 = scmp.eq.s32.totalorder %s34, 3
      %p297 = por %p295, %p296
      %p298 = scmp.ne.s32.totalorder %s290, %s293
      %p299 = scmp.eq.s32.totalorder %s34, 0
      %p300 = por %p298, %p299
      %p301 = scmp.ne.s32.totalorder %s290, %s293
      %p302 = scmp.eq.s32.totalorder %s39, 3
      %p303 = por %p301, %p302
      %p304 = scmp.ne.s32.totalorder %s293, %s294
      %p305 = scmp.eq.s32.totalorder %s39, 0
      %p306 = por %p304, %p305
      %p307 = scmp.ne.s32.totalorder %s293, %s294
      %p308 = scmp.eq.s32.totalorder %s40, 3
      %p309 = por %p307, %p308
      %p311 = scmp.ne.s32.totalorder %s294, %s310
      %p312 = scmp.eq.s32.totalorder %s40, 0
      %p313 = por %p311, %p312
      %s314 = ssub.s32 %s42, %s49
      %p315 = scmp.eq.s32.totalorder %s314, 0
      %s317 = sadd.s32 %s316, 1
      %s318 = scalar_select %p315, %s316, %s317
      %p321 = pneg %p315
      %p322 = scmp.eq.s32.totalorder %s34, 3
      %p323 = por %p321, %p322
      %p324 = scmp.ne.s32.totalorder %s316, %s319
      %p325 = scmp.eq.s32.totalorder %s34, 0
      %p326 = por %p324, %p325
      %p327 = scmp.ne.s32.totalorder %s316, %s319
      %p328 = scmp.eq.s32.totalorder %s39, 3
      %p329 = por %p327, %p328
      %p330 = scmp.ne.s32.totalorder %s319, %s320
      %p331 = scmp.eq.s32.totalorder %s39, 0
      %p332 = por %p330, %p331
      %p333 = scmp.ne.s32.totalorder %s319, %s320
      %p334 = scmp.eq.s32.totalorder %s40, 3
      %p335 = por %p333, %p334
      %p337 = scmp.ne.s32.totalorder %s320, %s336
      %p338 = scmp.eq.s32.totalorder %s40, 0
      %p339 = por %p337, %p338
      %s340 = ssub.s32 %s42, %s49
      %p341 = scmp.eq.s32.totalorder %s340, 0
      %s343 = sadd.s32 %s342, 1
      %s344 = scalar_select %p341, %s342, %s343
      %p347 = pneg %p341
      %p348 = scmp.eq.s32.totalorder %s34, 3
      %p349 = por %p347, %p348
      %p350 = scmp.ne.s32.totalorder %s342, %s345
      %p351 = scmp.eq.s32.totalorder %s34, 0
      %p352 = por %p350, %p351
      %p353 = scmp.ne.s32.totalorder %s342, %s345
      %p354 = scmp.eq.s32.totalorder %s39, 3
      %p355 = por %p353, %p354
      %p356 = scmp.ne.s32.totalorder %s345, %s346
      %p357 = scmp.eq.s32.totalorder %s39, 0
      %p358 = por %p356, %p357
      %p359 = scmp.ne.s32.totalorder %s345, %s346
      %p360 = scmp.eq.s32.totalorder %s40, 3
      %p361 = por %p359, %p360
      %p363 = scmp.ne.s32.totalorder %s346, %s362
      %p364 = scmp.eq.s32.totalorder %s40, 0
      %p365 = por %p363, %p364
      %s366 = ssub.s32 %s42, %s49
      %p367 = scmp.eq.s32.totalorder %s366, 0
      %s369 = sadd.s32 %s368, 1
      %s370 = scalar_select %p367, %s368, %s369
      %p373 = pneg %p367
      %p374 = scmp.eq.s32.totalorder %s34, 3
      %p375 = por %p373, %p374
      %p376 = scmp.ne.s32.totalorder %s368, %s371
      %p377 = scmp.eq.s32.totalorder %s34, 0
      %p378 = por %p376, %p377
      %p379 = scmp.ne.s32.totalorder %s368, %s371
      %p380 = scmp.eq.s32.totalorder %s39, 3
      %p381 = por %p379, %p380
      %p382 = scmp.ne.s32.totalorder %s371, %s372
      %p383 = scmp.eq.s32.totalorder %s39, 0
      %p384 = por %p382, %p383
      %p385 = scmp.ne.s32.totalorder %s371, %s372
      %p386 = scmp.eq.s32.totalorder %s40, 3
      %p387 = por %p385, %p386
      %p389 = scmp.ne.s32.totalorder %s372, %s388
      %p390 = scmp.eq.s32.totalorder %s40, 0
      %p391 = por %p389, %p390
      %s392 = ssub.s32 %s41, %s53
      %p393 = scmp.eq.s32.totalorder %s392, 0
      %s395 = sadd.s32 %s394, 1
      %s396 = scalar_select %p393, %s394, %s395
      %p399 = pneg %p393
      %p400 = scmp.eq.s32.totalorder %s34, 3
      %p401 = por %p399, %p400
      %p402 = scmp.ne.s32.totalorder %s394, %s397
      %p403 = scmp.eq.s32.totalorder %s34, 0
      %p404 = por %p402, %p403
      %p405 = scmp.ne.s32.totalorder %s394, %s397
      %p406 = scmp.eq.s32.totalorder %s39, 3
      %p407 = por %p405, %p406
      %p408 = scmp.ne.s32.totalorder %s397, %s398
      %p409 = scmp.eq.s32.totalorder %s39, 0
      %p410 = por %p408, %p409
      %p411 = scmp.ne.s32.totalorder %s397, %s398
      %p412 = scmp.eq.s32.totalorder %s40, 3
      %p413 = por %p411, %p412
      %p415 = scmp.ne.s32.totalorder %s398, %s414
      %p416 = scmp.eq.s32.totalorder %s40, 0
      %p417 = por %p415, %p416
      %p418 = scmp.le.s32.totalorder 1, %s34
      %p419 = scmp.lt.s32.totalorder %s34, 5
      %p420 = pnand %p418, %p419
      %p421 = pneg %p420
      // Predicated region
      $region9: #{tpu_custom_call.1} parent=5 // pred_check
        _
      $region10: #{tpu_custom_call.1} parent=5 // pred_check_branch
        %423 = sbr.rel (%p420) target = $region12
      $region11: #{tpu_custom_call.1} parent=5 // pred_region
        %s424 = ssub.s32 %s34, 1
      $region12: #{tpu_custom_call.1} parent=5 // pred_fallthru
        _
      %p425 = scmp.lt.s32.totalorder %s34, 4
      // Predicated region
      $region13: #{tpu_custom_call.1} parent=5 // pred_check
        %p426 = pneg %p425
      $region14: #{tpu_custom_call.1} parent=5 // pred_check_branch
        %428 = sbr.rel (%p426) target = $region16
      $region15: #{tpu_custom_call.1} parent=5 // pred_region
        // Predicated region
        $region17: #{tpu_custom_call.1} parent=15 // pred_check
          %p429 = pneg %p66
        $region18: #{tpu_custom_call.1} parent=15 // pred_check_branch
          %431 = sbr.rel (%p429) target = $region20
        $region19: #{tpu_custom_call.1} parent=15 // pred_region
          %s432 = sand.u32 %s56, 1
          %s433 = scalar_lea.sflag [#allocation4], %s432
          %s434 = sand.u32 %s56, 1
          %s435 = smul.addr %s434, 16
          %s436 = scalar_lea.vmem [#allocation3], %s435
          %s438 = ssub.s32 256, 256
          %439 = vsyncadd %s433, %s438
          %s440 = smul.addr %s41, 2
          %s441 = smul.addr %s440, 128
          %s442 = scalar_lea.hbm %s0, %s441
          %s443 = sshll.u32 %s436, 4
          %s444 = int_to_ptr.vmem [resolvable:$true] %s443
          %449 = dma.hbm_to_vmem [thread:$0]  %s442, 256, %s444, %s433, 128, 128, 8
        $region20: #{tpu_custom_call.1} parent=15 // pred_fallthru
          _
        // Predicated region
        $region21: #{tpu_custom_call.1} parent=15 // pred_check
          %p450 = pneg %p92
        $region22: #{tpu_custom_call.1} parent=15 // pred_check_branch
          %452 = sbr.rel (%p450) target = $region24
        $region23: #{tpu_custom_call.1} parent=15 // pred_region
          %s453 = sand.u32 %s34, 1
          %s454 = scalar_lea.sflag [#allocation7], %s453
          %s455 = sand.u32 %s82, 1
          %s456 = smul.addr %s455, 192
          %s457 = scalar_lea.vmem [#allocation6], %s456
          %s459 = ssub.s32 3072, 3072
          %460 = vsyncadd %s454, %s459
          %s461 = smul.addr %s42, 48
          %s462 = smul.addr %s461, 64
          %s463 = scalar_lea.hbm %s1, %s462
          %s464 = sshll.u32 %s457, 4
          %s465 = int_to_ptr.vmem [resolvable:$true] %s464
          %470 = dma.hbm_to_vmem [thread:$0]  %s463, 3072, %s465, %s454, 192, 192, 12
        $region24: #{tpu_custom_call.1} parent=15 // pred_fallthru
          _
        // Predicated region
        $region25: #{tpu_custom_call.1} parent=15 // pred_check
          %p471 = pneg %p118
        $region26: #{tpu_custom_call.1} parent=15 // pred_check_branch
          %473 = sbr.rel (%p471) target = $region28
        $region27: #{tpu_custom_call.1} parent=15 // pred_region
          %s474 = sand.u32 %s34, 1
          %s475 = scalar_lea.sflag [#allocation7], %s474
          %s476 = sand.u32 %s108, 1
          %s477 = smul.addr %s476, 64
          %s478 = scalar_lea.vmem [#allocation8], %s477
          %s480 = ssub.s32 1024, 1024
          %481 = vsyncadd %s475, %s480
          %s482 = smul.addr %s42, 16
          %s483 = smul.addr %s482, 64
          %s484 = scalar_lea.hbm %s2, %s483
          %s485 = sshll.u32 %s478, 4
          %s486 = int_to_ptr.vmem [resolvable:$true] %s485
          %491 = dma.hbm_to_vmem [thread:$0]  %s484, 1024, %s486, %s475, 64, 64, 4
        $region28: #{tpu_custom_call.1} parent=15 // pred_fallthru
          _
        // Predicated region
        $region29: #{tpu_custom_call.1} parent=15 // pred_check
          %p492 = pneg %p144
        $region30: #{tpu_custom_call.1} parent=15 // pred_check_branch
          %494 = sbr.rel (%p492) target = $region32
        $region31: #{tpu_custom_call.1} parent=15 // pred_region
          %s495 = sand.u32 %s34, 1
          %s496 = scalar_lea.sflag [#allocation10], %s495
          %s497 = sand.u32 %s134, 1
          %s498 = smul.addr %s497, 128
          %s499 = scalar_lea.vmem [#allocation9], %s498
          %s501 = ssub.s32 2048, 2048
          %502 = vsyncadd %s496, %s501
          %s503 = smul.addr %s42, 32
          %s504 = smul.addr %s503, 64
          %s505 = scalar_lea.hbm %s3, %s504
          %s506 = sshll.u32 %s499, 4
          %s507 = int_to_ptr.vmem [resolvable:$true] %s506
          %512 = dma.hbm_to_vmem [thread:$0]  %s505, 2048, %s507, %s496, 128, 128, 8
        $region32: #{tpu_custom_call.1} parent=15 // pred_fallthru
          _
        // Predicated region
        $region33: #{tpu_custom_call.1} parent=15 // pred_check
          %p513 = pneg %p170
        $region34: #{tpu_custom_call.1} parent=15 // pred_check_branch
          %515 = sbr.rel (%p513) target = $region36
        $region35: #{tpu_custom_call.1} parent=15 // pred_region
          %s516 = sand.u32 %s34, 1
          %s517 = scalar_lea.sflag [#allocation10], %s516
          %s518 = sand.u32 %s160, 1
          %s519 = smul.addr %s518, 128
          %s520 = scalar_lea.vmem [#allocation11], %s519
          %s522 = ssub.s32 2048, 2048
          %523 = vsyncadd %s517, %s522
          %s524 = smul.addr %s42, 32
          %s525 = smul.addr %s524, 64
          %s526 = scalar_lea.hbm %s4, %s525
          %s527 = sshll.u32 %s520, 4
          %s528 = int_to_ptr.vmem [resolvable:$true] %s527
          %533 = dma.hbm_to_vmem [thread:$0]  %s526, 2048, %s528, %s517, 64, 64, 4
        $region36: #{tpu_custom_call.1} parent=15 // pred_fallthru
          _
        // Predicated region
        $region37: #{tpu_custom_call.1} parent=15 // pred_check
          %p534 = pneg %p196
        $region38: #{tpu_custom_call.1} parent=15 // pred_check_branch
          %536 = sbr.rel (%p534) target = $region40
        $region39: #{tpu_custom_call.1} parent=15 // pred_region
          %p537 = scmp.lt.s32.totalorder %s42, 1
          %s538 = scalar_select %p537, %s42, 1
          %s539 = smul.addr %s538, 3
          %s540 = scalar_lea.vmem %s5, %s539
        $region40: #{tpu_custom_call.1} parent=15 // pred_fallthru
          _
        // Predicated region
        $region41: #{tpu_custom_call.1} parent=15 // pred_check
          %p541 = pneg %p222
        $region42: #{tpu_custom_call.1} parent=15 // pred_check_branch
          %543 = sbr.rel (%p541) target = $region44
        $region43: #{tpu_custom_call.1} parent=15 // pred_region
          %s544 = sand.u32 %s212, 1
          %s545 = scalar_lea.sflag [#allocation13], %s544
          %s546 = sand.u32 %s212, 1
          %s547 = scalar_lea.vmem [#allocation12], %s546
          %s549 = ssub.s32 16, 16
          %550 = vsyncadd %s545, %s549
          %s551 = smul.addr %s42, 16
          %s552 = scalar_lea.hbm %s6, %s551
          %s554 = sshll.u32 %s547, 4
          %s555 = int_to_ptr.vmem [resolvable:$true] %s554
          %557 = dma.hbm_to_vmem [thread:$0]  %s552, 16, %s555, %s545
        $region44: #{tpu_custom_call.1} parent=15 // pred_fallthru
          _
        // Predicated region
        $region45: #{tpu_custom_call.1} parent=15 // pred_check
          %p558 = pneg %p248
        $region46: #{tpu_custom_call.1} parent=15 // pred_check_branch
          %560 = sbr.rel (%p558) target = $region48
        $region47: #{tpu_custom_call.1} parent=15 // pred_region
          %p561 = scmp.lt.s32.totalorder %s42, 1
          %s562 = scalar_select %p561, %s42, 1
          %s563 = scalar_lea.vmem %s7, %s562
        $region48: #{tpu_custom_call.1} parent=15 // pred_fallthru
          _
        // Predicated region
        $region49: #{tpu_custom_call.1} parent=15 // pred_check
          %p564 = pneg %p274
        $region50: #{tpu_custom_call.1} parent=15 // pred_check_branch
          %566 = sbr.rel (%p564) target = $region52
        $region51: #{tpu_custom_call.1} parent=15 // pred_region
          %p567 = scmp.lt.s32.totalorder %s42, 1
          %s568 = scalar_select %p567, %s42, 1
          %s569 = scalar_lea.vmem %s8, %s568
        $region52: #{tpu_custom_call.1} parent=15 // pred_fallthru
          _
        // Predicated region
        $region53: #{tpu_custom_call.1} parent=15 // pred_check
          %p570 = pneg %p300
        $region54: #{tpu_custom_call.1} parent=15 // pred_check_branch
          %572 = sbr.rel (%p570) target = $region56
        $region55: #{tpu_custom_call.1} parent=15 // pred_region
          %p573 = scmp.lt.s32.totalorder %s42, 1
          %s574 = scalar_select %p573, %s42, 1
          %s575 = smul.addr %s574, 2
          %s576 = scalar_lea.vmem %s9, %s575
        $region56: #{tpu_custom_call.1} parent=15 // pred_fallthru
          _
        // Predicated region
        $region57: #{tpu_custom_call.1} parent=15 // pred_check
          %p577 = pneg %p326
        $region58: #{tpu_custom_call.1} parent=15 // pred_check_branch
          %579 = sbr.rel (%p577) target = $region60
        $region59: #{tpu_custom_call.1} parent=15 // pred_region
          %p580 = scmp.lt.s32.totalorder %s42, 1
          %s581 = scalar_select %p580, %s42, 1
          %s582 = scalar_lea.vmem %s10, %s581
        $region60: #{tpu_custom_call.1} parent=15 // pred_fallthru
          _
        // Predicated region
        $region61: #{tpu_custom_call.1} parent=15 // pred_check
          %p583 = pneg %p352
        $region62: #{tpu_custom_call.1} parent=15 // pred_check_branch
          %585 = sbr.rel (%p583) target = $region64
        $region63: #{tpu_custom_call.1} parent=15 // pred_region
          %p586 = scmp.lt.s32.totalorder %s42, 1
          %s587 = scalar_select %p586, %s42, 1
          %s588 = scalar_lea.vmem %s11, %s587
        $region64: #{tpu_custom_call.1} parent=15 // pred_fallthru
          _
        // Predicated region
        $region65: #{tpu_custom_call.1} parent=15 // pred_check
          %p589 = pneg %p378
        $region66: #{tpu_custom_call.1} parent=15 // pred_check_branch
          %591 = sbr.rel (%p589) target = $region68
        $region67: #{tpu_custom_call.1} parent=15 // pred_region
          %p592 = scmp.lt.s32.totalorder %s42, 1
          %s593 = scalar_select %p592, %s42, 1
          %s594 = scalar_lea.vmem %s12, %s593
        $region68: #{tpu_custom_call.1} parent=15 // pred_fallthru
          _
      $region16: #{tpu_custom_call.1} parent=5 // pred_fallthru
        _
      %p595 = scmp.le.s32.totalorder 1, %s34
      %p596 = scmp.lt.s32.totalorder %s34, 5
      %p597 = pnand %p595, %p596
      %p598 = pneg %p597
      // Predicated region
      $region69: #{tpu_custom_call.1} parent=5 // pred_check
        _
      $region70: #{tpu_custom_call.1} parent=5 // pred_check_branch
        %600 = sbr.rel (%p597) target = $region72
      $region71: #{tpu_custom_call.1} parent=5 // pred_region
        %s601 = ssub.s32 %s34, 1
        %s602 = sand.u32 %s59, 1
        %s603 = scalar_lea.sflag [#allocation4], %s602
        %s604 = sand.u32 %s59, 1
        %s605 = smul.addr %s604, 16
        %s606 = scalar_lea.vmem [#allocation3], %s605
        // Predicated region
        $region73: #{tpu_custom_call.1} parent=71 // pred_check
          %p607 = pneg %p72
        $region74: #{tpu_custom_call.1} parent=71 // pred_check_branch
          %609 = sbr.rel (%p607) target = $region76
        $region75: #{tpu_custom_call.1} parent=71 // pred_region
          %610 = dma.done %s603, 256
        $region76: #{tpu_custom_call.1} parent=71 // pred_fallthru
          _
        %s611 = sand.u32 %s39, 1
        %s612 = scalar_lea.sflag [#allocation7], %s611
        %s613 = sand.u32 %s85, 1
        %s614 = smul.addr %s613, 192
        %s615 = scalar_lea.vmem [#allocation6], %s614
        // Predicated region
        $region77: #{tpu_custom_call.1} parent=71 // pred_check
          %p616 = pneg %p98
        $region78: #{tpu_custom_call.1} parent=71 // pred_check_branch
          %618 = sbr.rel (%p616) target = $region80
        $region79: #{tpu_custom_call.1} parent=71 // pred_region
          %619 = dma.done %s612, 3072
        $region80: #{tpu_custom_call.1} parent=71 // pred_fallthru
          _
        %s620 = sand.u32 %s39, 1
        %s621 = scalar_lea.sflag [#allocation7], %s620
        %s622 = sand.u32 %s111, 1
        %s623 = smul.addr %s622, 64
        %s624 = scalar_lea.vmem [#allocation8], %s623
        // Predicated region
        $region81: #{tpu_custom_call.1} parent=71 // pred_check
          %p625 = pneg %p124
        $region82: #{tpu_custom_call.1} parent=71 // pred_check_branch
          %627 = sbr.rel (%p625) target = $region84
        $region83: #{tpu_custom_call.1} parent=71 // pred_region
          %628 = dma.done %s621, 1024
        $region84: #{tpu_custom_call.1} parent=71 // pred_fallthru
          _
        %s629 = sand.u32 %s39, 1
        %s630 = scalar_lea.sflag [#allocation10], %s629
        %s631 = sand.u32 %s137, 1
        %s632 = smul.addr %s631, 128
        %s633 = scalar_lea.vmem [#allocation9], %s632
        // Predicated region
        $region85: #{tpu_custom_call.1} parent=71 // pred_check
          %p634 = pneg %p150
        $region86: #{tpu_custom_call.1} parent=71 // pred_check_branch
          %636 = sbr.rel (%p634) target = $region88
        $region87: #{tpu_custom_call.1} parent=71 // pred_region
          %637 = dma.done %s630, 2048
        $region88: #{tpu_custom_call.1} parent=71 // pred_fallthru
          _
        %s638 = sand.u32 %s39, 1
        %s639 = scalar_lea.sflag [#allocation10], %s638
        %s640 = sand.u32 %s163, 1
        %s641 = smul.addr %s640, 128
        %s642 = scalar_lea.vmem [#allocation11], %s641
        // Predicated region
        $region89: #{tpu_custom_call.1} parent=71 // pred_check
          %p643 = pneg %p176
        $region90: #{tpu_custom_call.1} parent=71 // pred_check_branch
          %645 = sbr.rel (%p643) target = $region92
        $region91: #{tpu_custom_call.1} parent=71 // pred_region
          %646 = dma.done %s639, 2048
        $region92: #{tpu_custom_call.1} parent=71 // pred_fallthru
          _
        %s647 = sand.u32 %s215, 1
        %s648 = scalar_lea.sflag [#allocation13], %s647
        %s649 = sand.u32 %s215, 1
        %s650 = scalar_lea.vmem [#allocation12], %s649
        // Predicated region
        $region93: #{tpu_custom_call.1} parent=71 // pred_check
          %p651 = pneg %p228
        $region94: #{tpu_custom_call.1} parent=71 // pred_check_branch
          %653 = sbr.rel (%p651) target = $region96
        $region95: #{tpu_custom_call.1} parent=71 // pred_region
          %654 = dma.done %s648, 16
        $region96: #{tpu_custom_call.1} parent=71 // pred_fallthru
          _
        %s655 = sand.u32 %s59, 1
        %s656 = scalar_lea.sflag [#allocation4], %s655
        %s657 = sand.u32 %s59, 1
        %s658 = smul.addr %s657, 16
        %s659 = scalar_lea.vmem [#allocation3], %s658
        %p660 = pneg %p72
        %p661 = pneg %p69
        %s662 = sand.u32 %s39, 1
        %s663 = scalar_lea.sflag [#allocation7], %s662
        %s664 = sand.u32 %s85, 1
        %s665 = smul.addr %s664, 192
        %s666 = scalar_lea.vmem [#allocation6], %s665
        %p667 = pneg %p98
        %p668 = pneg %p95
        %s669 = sand.u32 %s39, 1
        %s670 = scalar_lea.sflag [#allocation7], %s669
        %s671 = sand.u32 %s111, 1
        %s672 = smul.addr %s671, 64
        %s673 = scalar_lea.vmem [#allocation8], %s672
        %p674 = pneg %p124
        %p675 = pneg %p121
        %s676 = sand.u32 %s39, 1
        %s677 = scalar_lea.sflag [#allocation10], %s676
        %s678 = sand.u32 %s137, 1
        %s679 = smul.addr %s678, 128
        %s680 = scalar_lea.vmem [#allocation9], %s679
        %p681 = pneg %p150
        %p682 = pneg %p147
        %s683 = sand.u32 %s39, 1
        %s684 = scalar_lea.sflag [#allocation10], %s683
        %s685 = sand.u32 %s163, 1
        %s686 = smul.addr %s685, 128
        %s687 = scalar_lea.vmem [#allocation11], %s686
        %p688 = pneg %p176
        %p689 = pneg %p173
        %p690 = scmp.lt.s32.totalorder %s44, 1
        %s691 = scalar_select %p690, %s44, 1
        %s692 = smul.addr %s691, 3
        %s693 = scalar_lea.vmem %s5, %s692
        %p694 = pneg %p202
        %p695 = pneg %p199
        %s696 = sand.u32 %s215, 1
        %s697 = scalar_lea.sflag [#allocation13], %s696
        %s698 = sand.u32 %s215, 1
        %s699 = scalar_lea.vmem [#allocation12], %s698
        %p700 = pneg %p228
        %p701 = pneg %p225
        %p702 = scmp.lt.s32.totalorder %s44, 1
        %s703 = scalar_select %p702, %s44, 1
        %s704 = scalar_lea.vmem %s7, %s703
        %p705 = pneg %p254
        %p706 = pneg %p251
        %p707 = scmp.lt.s32.totalorder %s44, 1
        %s708 = scalar_select %p707, %s44, 1
        %s709 = scalar_lea.vmem %s8, %s708
        %p710 = pneg %p280
        %p711 = pneg %p277
        %p712 = scmp.lt.s32.totalorder %s44, 1
        %s713 = scalar_select %p712, %s44, 1
        %s714 = smul.addr %s713, 2
        %s715 = scalar_lea.vmem %s9, %s714
        %p716 = pneg %p306
        %p717 = pneg %p303
        %p718 = scmp.lt.s32.totalorder %s44, 1
        %s719 = scalar_select %p718, %s44, 1
        %s720 = scalar_lea.vmem %s10, %s719
        %p721 = pneg %p332
        %p722 = pneg %p329
        %p723 = scmp.lt.s32.totalorder %s44, 1
        %s724 = scalar_select %p723, %s44, 1
        %s725 = scalar_lea.vmem %s11, %s724
        %p726 = pneg %p358
        %p727 = pneg %p355
        %p728 = scmp.lt.s32.totalorder %s44, 1
        %s729 = scalar_select %p728, %s44, 1
        %s730 = scalar_lea.vmem %s12, %s729
        %p731 = pneg %p384
        %p732 = pneg %p381
        %p733 = pneg %p410
        %p734 = pneg %p407
        %s735 = sand.u32 %s397, 1
        %s736 = scalar_lea.sflag [#allocation5], %s735
        %s737 = sand.u32 %s397, 1
        %s738 = smul.addr %s737, 16
        %s739 = scalar_lea.vmem [#allocation14], %s738
        %p740 = scmp.lt.s32.totalorder %s44, 1
        %s741 = scalar_select %p740, %s44, 1
        %s742 = smul.addr %s741, 3
        %s743 = scalar_lea.vmem %s5, %s742
        %p744 = scmp.lt.s32.totalorder %s44, 1
        %s745 = scalar_select %p744, %s44, 1
        %s746 = scalar_lea.vmem %s7, %s745
        %p747 = scmp.lt.s32.totalorder %s44, 1
        %s748 = scalar_select %p747, %s44, 1
        %s749 = scalar_lea.vmem %s8, %s748
        %p750 = scmp.lt.s32.totalorder %s44, 1
        %s751 = scalar_select %p750, %s44, 1
        %s752 = smul.addr %s751, 2
        %s753 = scalar_lea.vmem %s9, %s752
        %p754 = scmp.lt.s32.totalorder %s44, 1
        %s755 = scalar_select %p754, %s44, 1
        %s756 = scalar_lea.vmem %s10, %s755
        %p757 = scmp.lt.s32.totalorder %s44, 1
        %s758 = scalar_select %p757, %s44, 1
        %s759 = scalar_lea.vmem %s11, %s758
        %p760 = scmp.lt.s32.totalorder %s44, 1
        %s761 = scalar_select %p760, %s44, 1
        %s762 = scalar_lea.vmem %s12, %s761
        %p764 = scmp.eq.s32.totalorder %s44, 0
        // Predicated region
        $region97: #{tpu_custom_call.1} parent=71 // pred_check
          %p765 = pneg %p764
        $region98: #{tpu_custom_call.1} parent=71 // pred_check_branch
          %767 = sbr.rel (%p765) target = $region100
        $region99: #{tpu_custom_call.1} parent=71 // pred_region
          %v768 = vld [vmem:[%s606] sm:$0xff]
          %v769 = vld [vmem:[%s606 + $0x8] sm:$0xff]
          %770 = vst [vmem:[#allocation2] sm:$0xff] %v768
          %771 = vst [vmem:[#allocation2 + $0x8] sm:$0xff] %v769
        $region100: #{tpu_custom_call.1} parent=71 // pred_fallthru
          _
        %v772 = vld [vmem:[#allocation2] sm:$0xff]
        %v773 = vld [vmem:[#allocation2 + $0x8] sm:$0xff]
        %v774 = vlaneseq
        %v775 = vshrl.u32 %v774, 7
        %v776 = vadd.s32 %v775, 8
        %v777 = vlaneseq
        %v778 = vand.u32 %v777, 127
        %vm779 = vcmp.gt.s32.totalorder %v778, %v775
        %vm780 = vcmp.gt.s32.totalorder %v778, %v776
        %v781 = vld [vmem:[%s615] sm:$0xff]
        %v782 = vld [vmem:[%s615 + $0x8] sm:$0xf]
        %v783 = vld [vmem:[%s615 + $0xc] sm:$0xff]
        %v784 = vld [vmem:[%s615 + $0x14] sm:$0xf]
        %v785 = vld [vmem:[%s615 + $0x18] sm:$0xff]
        %v786 = vld [vmem:[%s615 + $0x20] sm:$0xf]
        %v787 = vld [vmem:[%s615 + $0x24] sm:$0xff]
        %v788 = vld [vmem:[%s615 + $0x2c] sm:$0xf]
        %v789 = vld [vmem:[%s615 + $0x30] sm:$0xff]
        %v790 = vld [vmem:[%s615 + $0x38] sm:$0xf]
        %v791 = vld [vmem:[%s615 + $0x3c] sm:$0xff]
        %v792 = vld [vmem:[%s615 + $0x44] sm:$0xf]
        %v793 = vld [vmem:[%s615 + $0x48] sm:$0xff]
        %v794 = vld [vmem:[%s615 + $0x50] sm:$0xf]
        %v795 = vld [vmem:[%s615 + $0x54] sm:$0xff]
        %v796 = vld [vmem:[%s615 + $0x5c] sm:$0xf]
        %v797 = vld [vmem:[%s615 + $0x60] sm:$0xff]
        %v798 = vld [vmem:[%s615 + $0x68] sm:$0xf]
        %v799 = vld [vmem:[%s615 + $0x6c] sm:$0xff]
        %v800 = vld [vmem:[%s615 + $0x74] sm:$0xf]
        %v801 = vld [vmem:[%s615 + $0x78] sm:$0xff]
        %v802 = vld [vmem:[%s615 + $0x80] sm:$0xf]
        %v803 = vld [vmem:[%s615 + $0x84] sm:$0xff]
        %v804 = vld [vmem:[%s615 + $0x8c] sm:$0xf]
        %v805 = vld [vmem:[%s615 + $0x90] sm:$0xff]
        %v806 = vld [vmem:[%s615 + $0x98] sm:$0xf]
        %v807 = vld [vmem:[%s615 + $0x9c] sm:$0xff]
        %v808 = vld [vmem:[%s615 + $0xa4] sm:$0xf]
        %v809 = vld [vmem:[%s615 + $0xa8] sm:$0xff]
        %v810 = vld [vmem:[%s615 + $0xb0] sm:$0xf]
        %v811 = vld [vmem:[%s615 + $0xb4] sm:$0xff]
        %v812 = vld [vmem:[%s615 + $0xbc] sm:$0xf]
        %v813 = vld [vmem:[%s743] sm:$0x7]
        %v815 = vlaneseq
        %v816 = vshrl.u32 %v815, 7
        %v817 = vsub.s32 0, %v816
        %v818 = vrot.slane %v813, %v817
        %v819 = vlaneseq
        %v820 = vshrl.u32 %v819, 7
        %v821 = vsub.s32 1, %v820
        %v822 = vrot.slane %v813, %v821
        %v823 = vlaneseq
        %v824 = vshrl.u32 %v823, 7
        %v825 = vsub.s32 2, %v824
        %v826 = vrot.slane %v813, %v825
        %v862 = vunpack.c.l.b16 %v781
        %v863 = vunpack.c.h.b16 %v781
        %v864 = vunpack.c.l.b16 %v782
        %v865 = vunpack.c.l.b16 %v783
        %v866 = vunpack.c.h.b16 %v783
        %v867 = vunpack.c.l.b16 %v784
        %v868 = vunpack.c.l.b16 %v785
        %v869 = vunpack.c.h.b16 %v785
        %v870 = vunpack.c.l.b16 %v786
        %v871 = vunpack.c.l.b16 %v787
        %v872 = vunpack.c.h.b16 %v787
        %v873 = vunpack.c.l.b16 %v788
        %v874 = vunpack.c.l.b16 %v789
        %v875 = vunpack.c.h.b16 %v789
        %v876 = vunpack.c.l.b16 %v790
        %v877 = vunpack.c.l.b16 %v791
        %v878 = vunpack.c.h.b16 %v791
        %v879 = vunpack.c.l.b16 %v792
        %v880 = vunpack.c.l.b16 %v793
        %v881 = vunpack.c.h.b16 %v793
        %v882 = vunpack.c.l.b16 %v794
        %v883 = vunpack.c.l.b16 %v795
        %v884 = vunpack.c.h.b16 %v795
        %v885 = vunpack.c.l.b16 %v796
        %v886 = vunpack.c.l.b16 %v797
        %v887 = vunpack.c.h.b16 %v797
        %v888 = vunpack.c.l.b16 %v798
        %v889 = vunpack.c.l.b16 %v799
        %v890 = vunpack.c.h.b16 %v799
        %v891 = vunpack.c.l.b16 %v800
        %v892 = vunpack.c.l.b16 %v801
        %v893 = vunpack.c.h.b16 %v801
        %v894 = vunpack.c.l.b16 %v802
        %v895 = vunpack.c.l.b16 %v803
        %v896 = vunpack.c.h.b16 %v803
        %v897 = vunpack.c.l.b16 %v804
        %v898 = vunpack.c.l.b16 %v805
        %v899 = vunpack.c.h.b16 %v805
        %v900 = vunpack.c.l.b16 %v806
        %v901 = vunpack.c.l.b16 %v807
        %v902 = vunpack.c.h.b16 %v807
        %v903 = vunpack.c.l.b16 %v808
        %v904 = vunpack.c.l.b16 %v809
        %v905 = vunpack.c.h.b16 %v809
        %v906 = vunpack.c.l.b16 %v810
        %v907 = vunpack.c.l.b16 %v811
        %v908 = vunpack.c.h.b16 %v811
        %v909 = vunpack.c.l.b16 %v812
        %v910 = vpack.c.b16 %v865, %v862
        %v911 = vpack.c.b16 %v866, %v863
        %v912 = vpack.c.b16 %v867, %v864
        %v913 = vpack.c.b16 %v871, %v868
        %v914 = vpack.c.b16 %v872, %v869
        %v915 = vpack.c.b16 %v873, %v870
        %v916 = vpack.c.b16 %v877, %v874
        %v917 = vpack.c.b16 %v878, %v875
        %v918 = vpack.c.b16 %v879, %v876
        %v919 = vpack.c.b16 %v883, %v880
        %v920 = vpack.c.b16 %v884, %v881
        %v921 = vpack.c.b16 %v885, %v882
        %v922 = vpack.c.b16 %v889, %v886
        %v923 = vpack.c.b16 %v890, %v887
        %v924 = vpack.c.b16 %v891, %v888
        %v925 = vpack.c.b16 %v895, %v892
        %v926 = vpack.c.b16 %v896, %v893
        %v927 = vpack.c.b16 %v897, %v894
        %v928 = vpack.c.b16 %v901, %v898
        %v929 = vpack.c.b16 %v902, %v899
        %v930 = vpack.c.b16 %v903, %v900
        %v931 = vpack.c.b16 %v907, %v904
        %v932 = vpack.c.b16 %v908, %v905
        %v933 = vpack.c.b16 %v909, %v906
        %958 = vmatprep.subr.bf16.mxu0 %v932
        %959 = vmatpush1.bf16.msra.mxu0 %v931
        %960 = vmatprep.subr.bf16.mxu0 %v929
        %961 = vmatpush1.bf16.msra.mxu0 %v928
        %962 = vmatprep.subr.bf16.mxu0 %v926
        %963 = vmatpush1.bf16.msra.mxu0 %v925
        %964 = vmatprep.subr.bf16.mxu0 %v923
        %965 = vmatpush1.bf16.msra.mxu0 %v922
        %966 = vmatprep.subr.bf16.mxu0 %v920
        %967 = vmatpush1.bf16.msra.mxu0 %v919
        %968 = vmatprep.subr.bf16.mxu0 %v917
        %969 = vmatpush1.bf16.msra.mxu0 %v916
        %970 = vmatprep.subr.bf16.mxu0 %v914
        %971 = vmatpush1.bf16.msra.mxu0 %v913
        %972 = vmatprep.subr.bf16.mxu0 %v911
        %973 = vmatpush1.bf16.msra.mxu0 %v910
        %974 = vmatprep.subr.bf16.mxu0 0
        %975 = vmatpush2.bf16.msra.mxu0 0
        %976 = vmatprep.subr.bf16.mxu0 0
        %977 = vmatpush2.bf16.msra.mxu0 0
        %978 = vmatprep.subr.bf16.mxu0 0
        %979 = vmatpush2.bf16.msra.mxu0 0
        %980 = vmatprep.subr.bf16.mxu0 0
        %981 = vmatpush2.bf16.msra.mxu0 0
        %982 = vmatprep.subr.bf16.mxu0 0
        %983 = vmatpush2.bf16.msra.mxu0 0
        %984 = vmatprep.subr.bf16.mxu0 0
        %985 = vmatpush2.bf16.msra.mxu0 0
        %986 = vmatprep.subr.bf16.mxu0 0
        %987 = vmatpush2.bf16.msra.mxu0 0
        %988 = vmatprep.subr.bf16.mxu0 0
        %989 = vmatpush2.bf16.msra.mxu0 0
        %990 = vmatprep.mubr.f32.mxu0 0.0
        %991 = vmatmul.mubr.f32.gmra.mxu0 %v772
        %v992 = vpop.f32.mrf.mxu0
        %v993 = vadd.f32 %v818, %v992
        %v994 = vpop.f32.mrf.mxu0
        %v995 = vadd.f32 %v822, %v994
        %996 = vmatprep.mubr.f32.mxu0 0.0
        %997 = vmatmul.mubr.f32.gmra.mxu0 %v773
        %v998 = vpop.f32.mrf.mxu0
        %v999 = vadd.f32 %v818, %v998
        %v1000 = vpop.f32.mrf.mxu0
        %v1001 = vadd.f32 %v822, %v1000
        %1002 = vdwg.mxu0
        %1003 = vmatprep.subr.bf16.mxu0 0
        %1004 = vmatpush1.bf16.msra.mxu0 %v933
        %1005 = vmatprep.subr.bf16.mxu0 0
        %1006 = vmatpush1.bf16.msra.mxu0 %v930
        %1007 = vmatprep.subr.bf16.mxu0 0
        %1008 = vmatpush1.bf16.msra.mxu0 %v927
        %1009 = vmatprep.subr.bf16.mxu0 0
        %1010 = vmatpush1.bf16.msra.mxu0 %v924
        %1011 = vmatprep.subr.bf16.mxu0 0
        %1012 = vmatpush1.bf16.msra.mxu0 %v921
        %1013 = vmatprep.subr.bf16.mxu0 0
        %1014 = vmatpush1.bf16.msra.mxu0 %v918
        %1015 = vmatprep.subr.bf16.mxu0 0
        %1016 = vmatpush1.bf16.msra.mxu0 %v915
        %1017 = vmatprep.subr.bf16.mxu0 0
        %1018 = vmatpush1.bf16.msra.mxu0 %v912
        %1019 = vmatprep.subr.bf16.mxu0 0
        %1020 = vmatpush2.bf16.msra.mxu0 0
        %1021 = vmatprep.subr.bf16.mxu0 0
        %1022 = vmatpush2.bf16.msra.mxu0 0
        %1023 = vmatprep.subr.bf16.mxu0 0
        %1024 = vmatpush2.bf16.msra.mxu0 0
        %1025 = vmatprep.subr.bf16.mxu0 0
        %1026 = vmatpush2.bf16.msra.mxu0 0
        %1027 = vmatprep.subr.bf16.mxu0 0
        %1028 = vmatpush2.bf16.msra.mxu0 0
        %1029 = vmatprep.subr.bf16.mxu0 0
        %1030 = vmatpush2.bf16.msra.mxu0 0
        %1031 = vmatprep.subr.bf16.mxu0 0
        %1032 = vmatpush2.bf16.msra.mxu0 0
        %1033 = vmatprep.subr.bf16.mxu0 0
        %1034 = vmatpush2.bf16.msra.mxu0 0
        %1035 = vmatprep.mubr.f32.mxu0 0.0
        %1036 = vmatmul.mubr.f32.gmra.mxu0 %v772
        %v1037 = vpop.f32.mrf.mxu0
        %v1038 = vadd.f32 %v826, %v1037
        %v1039 = vpop.f32.mrf.mxu0
        %1040 = vmatprep.mubr.f32.mxu0 0.0
        %1041 = vmatmul.mubr.f32.gmra.mxu0 %v773
        %v1042 = vpop.f32.mrf.mxu0
        %v1043 = vadd.f32 %v826, %v1042
        %v1044 = vpop.f32.mrf.mxu0
        %1045 = vdwg.mxu0
        %v1046 = vmul.f32 %v993, 0.17677666
        %v1047 = vmul.f32 %v999, 0.17677666
        %vm1048 = vcmask 261120
        %v1050 = vsel %vm1048, %v1046, 0
        %v1053 = vsel %vm1048, %v1047, 0
        %v1056 = vsel %vm1048, %v995, 0
        %v1059 = vsel %vm1048, %v1001, 0
        %1061 = vmatprep.subr.mxu0 0.0
        %1062 = vmatpush1.xpose.msra.mxu0 0.0
        %1063 = vmatprep.subr.mxu0 0.0
        %1064 = vmatpush1.xpose.msra.mxu0 0.0
        %1065 = vmatprep.subr.mxu0 0.0
        %1066 = vmatpush1.xpose.msra.mxu0 0.0
        %1067 = vmatprep.subr.mxu0 0.0
        %1068 = vmatpush1.xpose.msra.mxu0 0.0
        %1069 = vmatprep.subr.mxu0 0.0
        %1070 = vmatpush1.xpose.msra.mxu0 0.0
        %1071 = vmatprep.subr.mxu0 0.0
        %1072 = vmatpush1.xpose.msra.mxu0 0.0
        %1073 = vmatprep.subr.mxu0 0.0
        %1074 = vmatpush1.xpose.msra.mxu0 0.0
        %1075 = vmatprep.subr.mxu0 0.0
        %1076 = vmatpush1.xpose.msra.mxu0 0.0
        %1077 = vmatprep.subr.mxu0 0.0
        %1078 = vmatpush1.xpose.msra.mxu0 0.0
        %1079 = vmatprep.subr.mxu0 0.0
        %1080 = vmatpush1.xpose.msra.mxu0 0.0
        %1081 = vmatprep.subr.mxu0 0.0
        %1082 = vmatpush1.xpose.msra.mxu0 0.0
        %1083 = vmatprep.subr.mxu0 0.0
        %1084 = vmatpush1.xpose.msra.mxu0 0.0
        %1085 = vmatprep.subr.mxu0 0.0
        %1086 = vmatpush1.xpose.msra.mxu0 0.0
        %1087 = vmatprep.subr.mxu0 0.0
        %1088 = vmatpush1.xpose.msra.mxu0 0.0
        %1089 = vmatprep.subr.mxu0 0.0
        %1090 = vmatpush1.xpose.msra.mxu0 %v1059
        %1091 = vmatprep.subr.mxu0 0.0
        %1092 = vmatpush1.xpose.msra.mxu0 %v1056
        %1093 = vmatprep.subr.mxu0 0.0
        %1094 = vmatpush2.xpose.msra.mxu0 0.0
        %1095 = vmatprep.subr.mxu0 0.0
        %1096 = vmatpush2.xpose.msra.mxu0 0.0
        %1097 = vmatprep.subr.mxu0 0.0
        %1098 = vmatpush2.xpose.msra.mxu0 0.0
        %1099 = vmatprep.subr.mxu0 0.0
        %1100 = vmatpush2.xpose.msra.mxu0 0.0
        %1101 = vmatprep.subr.mxu0 0.0
        %1102 = vmatpush2.xpose.msra.mxu0 0.0
        %1103 = vmatprep.subr.mxu0 0.0
        %1104 = vmatpush2.xpose.msra.mxu0 0.0
        %1105 = vmatprep.subr.mxu0 0.0
        %1106 = vmatpush2.xpose.msra.mxu0 0.0
        %1107 = vmatprep.subr.mxu0 0.0
        %1108 = vmatpush2.xpose.msra.mxu0 0.0
        %1109 = vmatprep.subr.mxu0 0.0
        %1110 = vmatpush2.xpose.msra.mxu0 0.0
        %1111 = vmatprep.subr.mxu0 0.0
        %1112 = vmatpush2.xpose.msra.mxu0 0.0
        %1113 = vmatprep.subr.mxu0 0.0
        %1114 = vmatpush2.xpose.msra.mxu0 0.0
        %1115 = vmatprep.subr.mxu0 0.0
        %1116 = vmatpush2.xpose.msra.mxu0 0.0
        %1117 = vmatprep.subr.mxu0 0.0
        %1118 = vmatpush2.xpose.msra.mxu0 0.0
        %1119 = vmatprep.subr.mxu0 0.0
        %1120 = vmatpush2.xpose.msra.mxu0 0.0
        %1121 = vmatprep.subr.mxu0 0.0
        %1122 = vmatpush2.xpose.msra.mxu0 0.0
        %1123 = vmatprep.subr.mxu0 0.0
        %1124 = vmatpush2.xpose.msra.mxu0 0.0
        %1125 = vmatprep.mubr.f32.mxu0 0.0
        %1126 = vmatmul.mubr.f32.gmra.mxu0 %v1050
        %v1127 = vpop.f32.mrf.mxu0
        %v1128 = vadd.f32 0.0, %v1127
        %v1129 = vpop.f32.mrf.mxu0
        %1130 = vmatprep.mubr.f32.mxu0 0.0
        %1131 = vmatmul.mubr.f32.gmra.mxu0 %v1053
        %v1132 = vpop.f32.mrf.mxu0
        %v1133 = vadd.f32 0.0, %v1132
        %v1134 = vpop.f32.mrf.mxu0
        %1135 = vdwg.mxu0
        %v1136 = vmax.f32 %v1128, -100.0
        %v1137 = vmax.f32 %v1133, -100.0
        %v1138 = vmin.f32 %v1136, 100.0
        %v1139 = vmin.f32 %v1137, 100.0
        %v1140 = vsel %vm779, -10000.0, %v1138
        %v1141 = vsel %vm780, -10000.0, %v1139
        %vm1142 = vcmask 130048
        %v1143 = vsel %vm1142, %v1140, -inf
        %1144 = vmax.xlane.f32.xlu0 %v1143
        %v1145 = vpop.xlane.xlu0 %1144
        %v1146 = vsel %vm1142, %v1141, -inf
        %1147 = vmax.xlane.f32.xlu0 %v1146
        %v1148 = vpop.xlane.xlu0 %1147
        %v1149 = vsub.f32 %v1140, %v1145
        %v1150 = vsub.f32 %v1141, %v1148
        %v1151 = vmul.f32 %v1149, 1.442695
        %v1152 = vpow.pop %v1151
        %v1153 = vmul.f32 %v1150, 1.442695
        %v1154 = vpow.pop %v1153
        %v1155 = vsel %vm1142, %v1152, 0.0
        %1156 = vadd.xlane.f32.xlu0 %v1155
        %v1157 = vpop.xlane.xlu0 %1156
        %v1158 = vsel %vm1142, %v1154, 0.0
        %1159 = vadd.xlane.f32.xlu0 %v1158
        %v1160 = vpop.xlane.xlu0 %1159
        %v1161 = vrcp.pop %v1157
        %v1162 = vrcp.pop %v1160
        %v1163 = vmul.f32 %v1152, %v1161
        %v1164 = vmul.f32 %v1154, %v1162
        %v1165 = vmul.f32 %v1157, %v1161
        %v1166 = vmul.f32 %v1160, %v1162
        %v1167 = vadd.f32 %v1165, 1.6e-05
        %v1168 = vadd.f32 %v1166, 1.6e-05
        %v1169 = vrcp.pop %v1167
        %v1170 = vrcp.pop %v1168
        %v1171 = vadd.f32 %v1163, 1e-06
        %v1172 = vadd.f32 %v1164, 1e-06
        %v1173 = vmul.f32 %v1171, %v1169
        %v1174 = vmul.f32 %v1172, %v1170
        %v1176 = vsel %vm1142, %v1173, 0
        %v1179 = vsel %vm1142, %v1174, 0
        %1181 = vmatprep.subr.mxu0 0.0
        %1182 = vmatpush1.msra.mxu0 0.0
        %1183 = vmatprep.subr.mxu0 0.0
        %1184 = vmatpush1.msra.mxu0 0.0
        %1185 = vmatprep.subr.mxu0 0.0
        %1186 = vmatpush1.msra.mxu0 0.0
        %1187 = vmatprep.subr.mxu0 0.0
        %1188 = vmatpush1.msra.mxu0 0.0
        %1189 = vmatprep.subr.mxu0 0.0
        %1190 = vmatpush1.msra.mxu0 0.0
        %1191 = vmatprep.subr.mxu0 0.0
        %1192 = vmatpush1.msra.mxu0 0.0
        %1193 = vmatprep.subr.mxu0 0.0
        %1194 = vmatpush1.msra.mxu0 0.0
        %1195 = vmatprep.subr.mxu0 0.0
        %1196 = vmatpush1.msra.mxu0 0.0
        %1197 = vmatprep.subr.mxu0 0.0
        %1198 = vmatpush1.msra.mxu0 0.0
        %1199 = vmatprep.subr.mxu0 0.0
        %1200 = vmatpush1.msra.mxu0 0.0
        %1201 = vmatprep.subr.mxu0 0.0
        %1202 = vmatpush1.msra.mxu0 0.0
        %1203 = vmatprep.subr.mxu0 0.0
        %1204 = vmatpush1.msra.mxu0 0.0
        %1205 = vmatprep.subr.mxu0 0.0
        %1206 = vmatpush1.msra.mxu0 0.0
        %1207 = vmatprep.subr.mxu0 0.0
        %1208 = vmatpush1.msra.mxu0 0.0
        %1209 = vmatprep.subr.mxu0 0.0
        %1210 = vmatpush1.msra.mxu0 %v1043
        %1211 = vmatprep.subr.mxu0 0.0
        %1212 = vmatpush1.msra.mxu0 %v1038
        %1213 = vmatprep.subr.mxu0 0.0
        %1214 = vmatpush2.msra.mxu0 0.0
        %1215 = vmatprep.subr.mxu0 0.0
        %1216 = vmatpush2.msra.mxu0 0.0
        %1217 = vmatprep.subr.mxu0 0.0
        %1218 = vmatpush2.msra.mxu0 0.0
        %1219 = vmatprep.subr.mxu0 0.0
        %1220 = vmatpush2.msra.mxu0 0.0
        %1221 = vmatprep.subr.mxu0 0.0
        %1222 = vmatpush2.msra.mxu0 0.0
        %1223 = vmatprep.subr.mxu0 0.0
        %1224 = vmatpush2.msra.mxu0 0.0
        %1225 = vmatprep.subr.mxu0 0.0
        %1226 = vmatpush2.msra.mxu0 0.0
        %1227 = vmatprep.subr.mxu0 0.0
        %1228 = vmatpush2.msra.mxu0 0.0
        %1229 = vmatprep.subr.mxu0 0.0
        %1230 = vmatpush2.msra.mxu0 0.0
        %1231 = vmatprep.subr.mxu0 0.0
        %1232 = vmatpush2.msra.mxu0 0.0
        %1233 = vmatprep.subr.mxu0 0.0
        %1234 = vmatpush2.msra.mxu0 0.0
        %1235 = vmatprep.subr.mxu0 0.0
        %1236 = vmatpush2.msra.mxu0 0.0
        %1237 = vmatprep.subr.mxu0 0.0
        %1238 = vmatpush2.msra.mxu0 0.0
        %1239 = vmatprep.subr.mxu0 0.0
        %1240 = vmatpush2.msra.mxu0 0.0
        %1241 = vmatprep.subr.mxu0 0.0
        %1242 = vmatpush2.msra.mxu0 0.0
        %1243 = vmatprep.subr.mxu0 0.0
        %1244 = vmatpush2.msra.mxu0 0.0
        %1245 = vmatprep.mubr.f32.mxu0 0.0
        %1246 = vmatmul.mubr.f32.gmra.mxu0 %v1176
        %v1247 = vpop.f32.mrf.mxu0
        %v1248 = vadd.f32 0.0, %v1247
        %v1249 = vpop.f32.mrf.mxu0
        %1250 = vmatprep.mubr.f32.mxu0 0.0
        %1251 = vmatmul.mubr.f32.gmra.mxu0 %v1179
        %v1252 = vpop.f32.mrf.mxu0
        %v1253 = vadd.f32 0.0, %v1252
        %v1254 = vpop.f32.mrf.mxu0
        %1255 = vdwg.mxu0
        %1256 = vrot.lane.b32.xlu0 %v1046, 96
        %v1257 = vpop.permute.xlu0 %1256
        %1258 = vrot.lane.b32.xlu0 %v1047, 96
        %v1259 = vpop.permute.xlu0 %1258
        %1260 = vrot.lane.b32.xlu0 %v995, 96
        %v1261 = vpop.permute.xlu0 %1260
        %1262 = vrot.lane.b32.xlu0 %v1001, 96
        %v1263 = vpop.permute.xlu0 %1262
        %v1264 = vsel %vm1048, %v1257, 0
        %v1266 = vsel %vm1048, %v1259, 0
        %v1268 = vsel %vm1048, %v1261, 0
        %v1270 = vsel %vm1048, %v1263, 0
        %1272 = vmatprep.subr.mxu0 0.0
        %1273 = vmatpush1.xpose.msra.mxu0 0.0
        %1274 = vmatprep.subr.mxu0 0.0
        %1275 = vmatpush1.xpose.msra.mxu0 0.0
        %1276 = vmatprep.subr.mxu0 0.0
        %1277 = vmatpush1.xpose.msra.mxu0 0.0
        %1278 = vmatprep.subr.mxu0 0.0
        %1279 = vmatpush1.xpose.msra.mxu0 0.0
        %1280 = vmatprep.subr.mxu0 0.0
        %1281 = vmatpush1.xpose.msra.mxu0 0.0
        %1282 = vmatprep.subr.mxu0 0.0
        %1283 = vmatpush1.xpose.msra.mxu0 0.0
        %1284 = vmatprep.subr.mxu0 0.0
        %1285 = vmatpush1.xpose.msra.mxu0 0.0
        %1286 = vmatprep.subr.mxu0 0.0
        %1287 = vmatpush1.xpose.msra.mxu0 0.0
        %1288 = vmatprep.subr.mxu0 0.0
        %1289 = vmatpush1.xpose.msra.mxu0 0.0
        %1290 = vmatprep.subr.mxu0 0.0
        %1291 = vmatpush1.xpose.msra.mxu0 0.0
        %1292 = vmatprep.subr.mxu0 0.0
        %1293 = vmatpush1.xpose.msra.mxu0 0.0
        %1294 = vmatprep.subr.mxu0 0.0
        %1295 = vmatpush1.xpose.msra.mxu0 0.0
        %1296 = vmatprep.subr.mxu0 0.0
        %1297 = vmatpush1.xpose.msra.mxu0 0.0
        %1298 = vmatprep.subr.mxu0 0.0
        %1299 = vmatpush1.xpose.msra.mxu0 0.0
        %1300 = vmatprep.subr.mxu0 0.0
        %1301 = vmatpush1.xpose.msra.mxu0 %v1270
        %1302 = vmatprep.subr.mxu0 0.0
        %1303 = vmatpush1.xpose.msra.mxu0 %v1268
        %1304 = vmatprep.subr.mxu0 0.0
        %1305 = vmatpush2.xpose.msra.mxu0 0.0
        %1306 = vmatprep.subr.mxu0 0.0
        %1307 = vmatpush2.xpose.msra.mxu0 0.0
        %1308 = vmatprep.subr.mxu0 0.0
        %1309 = vmatpush2.xpose.msra.mxu0 0.0
        %1310 = vmatprep.subr.mxu0 0.0
        %1311 = vmatpush2.xpose.msra.mxu0 0.0
        %1312 = vmatprep.subr.mxu0 0.0
        %1313 = vmatpush2.xpose.msra.mxu0 0.0
        %1314 = vmatprep.subr.mxu0 0.0
        %1315 = vmatpush2.xpose.msra.mxu0 0.0
        %1316 = vmatprep.subr.mxu0 0.0
        %1317 = vmatpush2.xpose.msra.mxu0 0.0
        %1318 = vmatprep.subr.mxu0 0.0
        %1319 = vmatpush2.xpose.msra.mxu0 0.0
        %1320 = vmatprep.subr.mxu0 0.0
        %1321 = vmatpush2.xpose.msra.mxu0 0.0
        %1322 = vmatprep.subr.mxu0 0.0
        %1323 = vmatpush2.xpose.msra.mxu0 0.0
        %1324 = vmatprep.subr.mxu0 0.0
        %1325 = vmatpush2.xpose.msra.mxu0 0.0
        %1326 = vmatprep.subr.mxu0 0.0
        %1327 = vmatpush2.xpose.msra.mxu0 0.0
        %1328 = vmatprep.subr.mxu0 0.0
        %1329 = vmatpush2.xpose.msra.mxu0 0.0
        %1330 = vmatprep.subr.mxu0 0.0
        %1331 = vmatpush2.xpose.msra.mxu0 0.0
        %1332 = vmatprep.subr.mxu0 0.0
        %1333 = vmatpush2.xpose.msra.mxu0 0.0
        %1334 = vmatprep.subr.mxu0 0.0
        %1335 = vmatpush2.xpose.msra.mxu0 0.0
        %1336 = vmatprep.mubr.f32.mxu0 0.0
        %1337 = vmatmul.mubr.f32.gmra.mxu0 %v1264
        %v1338 = vpop.f32.mrf.mxu0
        %v1339 = vadd.f32 0.0, %v1338
        %v1340 = vpop.f32.mrf.mxu0
        %1341 = vmatprep.mubr.f32.mxu0 0.0
        %1342 = vmatmul.mubr.f32.gmra.mxu0 %v1266
        %v1343 = vpop.f32.mrf.mxu0
        %v1344 = vadd.f32 0.0, %v1343
        %v1345 = vpop.f32.mrf.mxu0
        %1346 = vdwg.mxu0
        %v1347 = vmax.f32 %v1339, -100.0
        %v1348 = vmax.f32 %v1344, -100.0
        %v1349 = vmin.f32 %v1347, 100.0
        %v1350 = vmin.f32 %v1348, 100.0
        %v1351 = vsel %vm779, -10000.0, %v1349
        %v1352 = vsel %vm780, -10000.0, %v1350
        %v1353 = vsel %vm1142, %v1351, -inf
        %1354 = vmax.xlane.f32.xlu0 %v1353
        %v1355 = vpop.xlane.xlu0 %1354
        %v1356 = vsel %vm1142, %v1352, -inf
        %1357 = vmax.xlane.f32.xlu0 %v1356
        %v1358 = vpop.xlane.xlu0 %1357
        %v1359 = vsub.f32 %v1351, %v1355
        %v1360 = vsub.f32 %v1352, %v1358
        %v1361 = vmul.f32 %v1359, 1.442695
        %v1362 = vpow.pop %v1361
        %v1363 = vmul.f32 %v1360, 1.442695
        %v1364 = vpow.pop %v1363
        %v1365 = vsel %vm1142, %v1362, 0.0
        %1366 = vadd.xlane.f32.xlu0 %v1365
        %v1367 = vpop.xlane.xlu0 %1366
        %v1368 = vsel %vm1142, %v1364, 0.0
        %1369 = vadd.xlane.f32.xlu0 %v1368
        %v1370 = vpop.xlane.xlu0 %1369
        %v1371 = vrcp.pop %v1367
        %v1372 = vrcp.pop %v1370
        %v1373 = vmul.f32 %v1362, %v1371
        %v1374 = vmul.f32 %v1364, %v1372
        %v1375 = vmul.f32 %v1367, %v1371
        %v1376 = vmul.f32 %v1370, %v1372
        %v1377 = vadd.f32 %v1375, 1.6e-05
        %v1378 = vadd.f32 %v1376, 1.6e-05
        %v1379 = vrcp.pop %v1377
        %v1380 = vrcp.pop %v1378
        %v1381 = vadd.f32 %v1373, 1e-06
        %v1382 = vadd.f32 %v1374, 1e-06
        %v1383 = vmul.f32 %v1381, %v1379
        %v1384 = vmul.f32 %v1382, %v1380
        %1387 = vrot.lane.b32.xlu0 %v1038, 96
        %v1388 = vpop.permute.xlu0 %1387
        %1389 = vrot.lane.b32.xlu0 %v1043, 96
        %v1390 = vpop.permute.xlu0 %1389
        %v1394 = vsel %vm1142, %v1383, 0
        %v1397 = vsel %vm1142, %v1384, 0
        %1399 = vmatprep.subr.mxu0 0.0
        %1400 = vmatpush1.msra.mxu0 0.0
        %1401 = vmatprep.subr.mxu0 0.0
        %1402 = vmatpush1.msra.mxu0 0.0
        %1403 = vmatprep.subr.mxu0 0.0
        %1404 = vmatpush1.msra.mxu0 0.0
        %1405 = vmatprep.subr.mxu0 0.0
        %1406 = vmatpush1.msra.mxu0 0.0
        %1407 = vmatprep.subr.mxu0 0.0
        %1408 = vmatpush1.msra.mxu0 0.0
        %1409 = vmatprep.subr.mxu0 0.0
        %1410 = vmatpush1.msra.mxu0 0.0
        %1411 = vmatprep.subr.mxu0 0.0
        %1412 = vmatpush1.msra.mxu0 0.0
        %1413 = vmatprep.subr.mxu0 0.0
        %1414 = vmatpush1.msra.mxu0 0.0
        %1415 = vmatprep.subr.mxu0 0.0
        %1416 = vmatpush1.msra.mxu0 0.0
        %1417 = vmatprep.subr.mxu0 0.0
        %1418 = vmatpush1.msra.mxu0 0.0
        %1419 = vmatprep.subr.mxu0 0.0
        %1420 = vmatpush1.msra.mxu0 0.0
        %1421 = vmatprep.subr.mxu0 0.0
        %1422 = vmatpush1.msra.mxu0 0.0
        %1423 = vmatprep.subr.mxu0 0.0
        %1424 = vmatpush1.msra.mxu0 0.0
        %1425 = vmatprep.subr.mxu0 0.0
        %1426 = vmatpush1.msra.mxu0 0.0
        %1427 = vmatprep.subr.mxu0 0.0
        %1428 = vmatpush1.msra.mxu0 %v1390
        %1429 = vmatprep.subr.mxu0 0.0
        %1430 = vmatpush1.msra.mxu0 %v1388
        %1431 = vmatprep.subr.mxu0 0.0
        %1432 = vmatpush2.msra.mxu0 0.0
        %1433 = vmatprep.subr.mxu0 0.0
        %1434 = vmatpush2.msra.mxu0 0.0
        %1435 = vmatprep.subr.mxu0 0.0
        %1436 = vmatpush2.msra.mxu0 0.0
        %1437 = vmatprep.subr.mxu0 0.0
        %1438 = vmatpush2.msra.mxu0 0.0
        %1439 = vmatprep.subr.mxu0 0.0
        %1440 = vmatpush2.msra.mxu0 0.0
        %1441 = vmatprep.subr.mxu0 0.0
        %1442 = vmatpush2.msra.mxu0 0.0
        %1443 = vmatprep.subr.mxu0 0.0
        %1444 = vmatpush2.msra.mxu0 0.0
        %1445 = vmatprep.subr.mxu0 0.0
        %1446 = vmatpush2.msra.mxu0 0.0
        %1447 = vmatprep.subr.mxu0 0.0
        %1448 = vmatpush2.msra.mxu0 0.0
        %1449 = vmatprep.subr.mxu0 0.0
        %1450 = vmatpush2.msra.mxu0 0.0
        %1451 = vmatprep.subr.mxu0 0.0
        %1452 = vmatpush2.msra.mxu0 0.0
        %1453 = vmatprep.subr.mxu0 0.0
        %1454 = vmatpush2.msra.mxu0 0.0
        %1455 = vmatprep.subr.mxu0 0.0
        %1456 = vmatpush2.msra.mxu0 0.0
        %1457 = vmatprep.subr.mxu0 0.0
        %1458 = vmatpush2.msra.mxu0 0.0
        %1459 = vmatprep.subr.mxu0 0.0
        %1460 = vmatpush2.msra.mxu0 0.0
        %1461 = vmatprep.subr.mxu0 0.0
        %1462 = vmatpush2.msra.mxu0 0.0
        %1463 = vmatprep.mubr.f32.mxu0 0.0
        %1464 = vmatmul.mubr.f32.gmra.mxu0 %v1394
        %v1465 = vpop.f32.mrf.mxu0
        %v1466 = vadd.f32 0.0, %v1465
        %v1467 = vpop.f32.mrf.mxu0
        %1468 = vmatprep.mubr.f32.mxu0 0.0
        %1469 = vmatmul.mubr.f32.gmra.mxu0 %v1397
        %v1470 = vpop.f32.mrf.mxu0
        %v1471 = vadd.f32 0.0, %v1470
        %v1472 = vpop.f32.mrf.mxu0
        %1473 = vdwg.mxu0
        %1474 = vrot.lane.b32.xlu0 %v1046, 64
        %v1475 = vpop.permute.xlu0 %1474
        %1476 = vrot.lane.b32.xlu0 %v1047, 64
        %v1477 = vpop.permute.xlu0 %1476
        %1478 = vrot.lane.b32.xlu0 %v995, 64
        %v1479 = vpop.permute.xlu0 %1478
        %1480 = vrot.lane.b32.xlu0 %v1001, 64
        %v1481 = vpop.permute.xlu0 %1480
        %v1482 = vsel %vm1048, %v1475, 0
        %v1484 = vsel %vm1048, %v1477, 0
        %v1486 = vsel %vm1048, %v1479, 0
        %v1488 = vsel %vm1048, %v1481, 0
        %1490 = vmatprep.subr.mxu0 0.0
        %1491 = vmatpush1.xpose.msra.mxu0 0.0
        %1492 = vmatprep.subr.mxu0 0.0
        %1493 = vmatpush1.xpose.msra.mxu0 0.0
        %1494 = vmatprep.subr.mxu0 0.0
        %1495 = vmatpush1.xpose.msra.mxu0 0.0
        %1496 = vmatprep.subr.mxu0 0.0
        %1497 = vmatpush1.xpose.msra.mxu0 0.0
        %1498 = vmatprep.subr.mxu0 0.0
        %1499 = vmatpush1.xpose.msra.mxu0 0.0
        %1500 = vmatprep.subr.mxu0 0.0
        %1501 = vmatpush1.xpose.msra.mxu0 0.0
        %1502 = vmatprep.subr.mxu0 0.0
        %1503 = vmatpush1.xpose.msra.mxu0 0.0
        %1504 = vmatprep.subr.mxu0 0.0
        %1505 = vmatpush1.xpose.msra.mxu0 0.0
        %1506 = vmatprep.subr.mxu0 0.0
        %1507 = vmatpush1.xpose.msra.mxu0 0.0
        %1508 = vmatprep.subr.mxu0 0.0
        %1509 = vmatpush1.xpose.msra.mxu0 0.0
        %1510 = vmatprep.subr.mxu0 0.0
        %1511 = vmatpush1.xpose.msra.mxu0 0.0
        %1512 = vmatprep.subr.mxu0 0.0
        %1513 = vmatpush1.xpose.msra.mxu0 0.0
        %1514 = vmatprep.subr.mxu0 0.0
        %1515 = vmatpush1.xpose.msra.mxu0 0.0
        %1516 = vmatprep.subr.mxu0 0.0
        %1517 = vmatpush1.xpose.msra.mxu0 0.0
        %1518 = vmatprep.subr.mxu0 0.0
        %1519 = vmatpush1.xpose.msra.mxu0 %v1488
        %1520 = vmatprep.subr.mxu0 0.0
        %1521 = vmatpush1.xpose.msra.mxu0 %v1486
        %1522 = vmatprep.subr.mxu0 0.0
        %1523 = vmatpush2.xpose.msra.mxu0 0.0
        %1524 = vmatprep.subr.mxu0 0.0
        %1525 = vmatpush2.xpose.msra.mxu0 0.0
        %1526 = vmatprep.subr.mxu0 0.0
        %1527 = vmatpush2.xpose.msra.mxu0 0.0
        %1528 = vmatprep.subr.mxu0 0.0
        %1529 = vmatpush2.xpose.msra.mxu0 0.0
        %1530 = vmatprep.subr.mxu0 0.0
        %1531 = vmatpush2.xpose.msra.mxu0 0.0
        %1532 = vmatprep.subr.mxu0 0.0
        %1533 = vmatpush2.xpose.msra.mxu0 0.0
        %1534 = vmatprep.subr.mxu0 0.0
        %1535 = vmatpush2.xpose.msra.mxu0 0.0
        %1536 = vmatprep.subr.mxu0 0.0
        %1537 = vmatpush2.xpose.msra.mxu0 0.0
        %1538 = vmatprep.subr.mxu0 0.0
        %1539 = vmatpush2.xpose.msra.mxu0 0.0
        %1540 = vmatprep.subr.mxu0 0.0
        %1541 = vmatpush2.xpose.msra.mxu0 0.0
        %1542 = vmatprep.subr.mxu0 0.0
        %1543 = vmatpush2.xpose.msra.mxu0 0.0
        %1544 = vmatprep.subr.mxu0 0.0
        %1545 = vmatpush2.xpose.msra.mxu0 0.0
        %1546 = vmatprep.subr.mxu0 0.0
        %1547 = vmatpush2.xpose.msra.mxu0 0.0
        %1548 = vmatprep.subr.mxu0 0.0
        %1549 = vmatpush2.xpose.msra.mxu0 0.0
        %1550 = vmatprep.subr.mxu0 0.0
        %1551 = vmatpush2.xpose.msra.mxu0 0.0
        %1552 = vmatprep.subr.mxu0 0.0
        %1553 = vmatpush2.xpose.msra.mxu0 0.0
        %1554 = vmatprep.mubr.f32.mxu0 0.0
        %1555 = vmatmul.mubr.f32.gmra.mxu0 %v1482
        %v1556 = vpop.f32.mrf.mxu0
        %v1557 = vadd.f32 0.0, %v1556
        %v1558 = vpop.f32.mrf.mxu0
        %1559 = vmatprep.mubr.f32.mxu0 0.0
        %1560 = vmatmul.mubr.f32.gmra.mxu0 %v1484
        %v1561 = vpop.f32.mrf.mxu0
        %v1562 = vadd.f32 0.0, %v1561
        %v1563 = vpop.f32.mrf.mxu0
        %1564 = vdwg.mxu0
        %v1565 = vmax.f32 %v1557, -100.0
        %v1566 = vmax.f32 %v1562, -100.0
        %v1567 = vmin.f32 %v1565, 100.0
        %v1568 = vmin.f32 %v1566, 100.0
        %v1569 = vsel %vm779, -10000.0, %v1567
        %v1570 = vsel %vm780, -10000.0, %v1568
        %v1571 = vsel %vm1142, %v1569, -inf
        %1572 = vmax.xlane.f32.xlu0 %v1571
        %v1573 = vpop.xlane.xlu0 %1572
        %v1574 = vsel %vm1142, %v1570, -inf
        %1575 = vmax.xlane.f32.xlu0 %v1574
        %v1576 = vpop.xlane.xlu0 %1575
        %v1577 = vsub.f32 %v1569, %v1573
        %v1578 = vsub.f32 %v1570, %v1576
        %v1579 = vmul.f32 %v1577, 1.442695
        %v1580 = vpow.pop %v1579
        %v1581 = vmul.f32 %v1578, 1.442695
        %v1582 = vpow.pop %v1581
        %v1583 = vsel %vm1142, %v1580, 0.0
        %1584 = vadd.xlane.f32.xlu0 %v1583
        %v1585 = vpop.xlane.xlu0 %1584
        %v1586 = vsel %vm1142, %v1582, 0.0
        %1587 = vadd.xlane.f32.xlu0 %v1586
        %v1588 = vpop.xlane.xlu0 %1587
        %v1589 = vrcp.pop %v1585
        %v1590 = vrcp.pop %v1588
        %v1591 = vmul.f32 %v1580, %v1589
        %v1592 = vmul.f32 %v1582, %v1590
        %v1593 = vmul.f32 %v1585, %v1589
        %v1594 = vmul.f32 %v1588, %v1590
        %v1595 = vadd.f32 %v1593, 1.6e-05
        %v1596 = vadd.f32 %v1594, 1.6e-05
        %v1597 = vrcp.pop %v1595
        %v1598 = vrcp.pop %v1596
        %v1599 = vadd.f32 %v1591, 1e-06
        %v1600 = vadd.f32 %v1592, 1e-06
        %v1601 = vmul.f32 %v1599, %v1597
        %v1602 = vmul.f32 %v1600, %v1598
        %1603 = vrot.lane.b32.xlu0 %v1038, 64
        %v1604 = vpop.permute.xlu0 %1603
        %1605 = vrot.lane.b32.xlu0 %v1043, 64
        %v1606 = vpop.permute.xlu0 %1605
        %v1610 = vsel %vm1142, %v1601, 0
        %v1613 = vsel %vm1142, %v1602, 0
        %1615 = vmatprep.subr.mxu0 0.0
        %1616 = vmatpush1.msra.mxu0 0.0
        %1617 = vmatprep.subr.mxu0 0.0
        %1618 = vmatpush1.msra.mxu0 0.0
        %1619 = vmatprep.subr.mxu0 0.0
        %1620 = vmatpush1.msra.mxu0 0.0
        %1621 = vmatprep.subr.mxu0 0.0
        %1622 = vmatpush1.msra.mxu0 0.0
        %1623 = vmatprep.subr.mxu0 0.0
        %1624 = vmatpush1.msra.mxu0 0.0
        %1625 = vmatprep.subr.mxu0 0.0
        %1626 = vmatpush1.msra.mxu0 0.0
        %1627 = vmatprep.subr.mxu0 0.0
        %1628 = vmatpush1.msra.mxu0 0.0
        %1629 = vmatprep.subr.mxu0 0.0
        %1630 = vmatpush1.msra.mxu0 0.0
        %1631 = vmatprep.subr.mxu0 0.0
        %1632 = vmatpush1.msra.mxu0 0.0
        %1633 = vmatprep.subr.mxu0 0.0
        %1634 = vmatpush1.msra.mxu0 0.0
        %1635 = vmatprep.subr.mxu0 0.0
        %1636 = vmatpush1.msra.mxu0 0.0
        %1637 = vmatprep.subr.mxu0 0.0
        %1638 = vmatpush1.msra.mxu0 0.0
        %1639 = vmatprep.subr.mxu0 0.0
        %1640 = vmatpush1.msra.mxu0 0.0
        %1641 = vmatprep.subr.mxu0 0.0
        %1642 = vmatpush1.msra.mxu0 0.0
        %1643 = vmatprep.subr.mxu0 0.0
        %1644 = vmatpush1.msra.mxu0 %v1606
        %1645 = vmatprep.subr.mxu0 0.0
        %1646 = vmatpush1.msra.mxu0 %v1604
        %1647 = vmatprep.subr.mxu0 0.0
        %1648 = vmatpush2.msra.mxu0 0.0
        %1649 = vmatprep.subr.mxu0 0.0
        %1650 = vmatpush2.msra.mxu0 0.0
        %1651 = vmatprep.subr.mxu0 0.0
        %1652 = vmatpush2.msra.mxu0 0.0
        %1653 = vmatprep.subr.mxu0 0.0
        %1654 = vmatpush2.msra.mxu0 0.0
        %1655 = vmatprep.subr.mxu0 0.0
        %1656 = vmatpush2.msra.mxu0 0.0
        %1657 = vmatprep.subr.mxu0 0.0
        %1658 = vmatpush2.msra.mxu0 0.0
        %1659 = vmatprep.subr.mxu0 0.0
        %1660 = vmatpush2.msra.mxu0 0.0
        %1661 = vmatprep.subr.mxu0 0.0
        %1662 = vmatpush2.msra.mxu0 0.0
        %1663 = vmatprep.subr.mxu0 0.0
        %1664 = vmatpush2.msra.mxu0 0.0
        %1665 = vmatprep.subr.mxu0 0.0
        %1666 = vmatpush2.msra.mxu0 0.0
        %1667 = vmatprep.subr.mxu0 0.0
        %1668 = vmatpush2.msra.mxu0 0.0
        %1669 = vmatprep.subr.mxu0 0.0
        %1670 = vmatpush2.msra.mxu0 0.0
        %1671 = vmatprep.subr.mxu0 0.0
        %1672 = vmatpush2.msra.mxu0 0.0
        %1673 = vmatprep.subr.mxu0 0.0
        %1674 = vmatpush2.msra.mxu0 0.0
        %1675 = vmatprep.subr.mxu0 0.0
        %1676 = vmatpush2.msra.mxu0 0.0
        %1677 = vmatprep.subr.mxu0 0.0
        %1678 = vmatpush2.msra.mxu0 0.0
        %1679 = vmatprep.mubr.f32.mxu0 0.0
        %1680 = vmatmul.mubr.f32.gmra.mxu0 %v1610
        %v1681 = vpop.f32.mrf.mxu0
        %v1682 = vadd.f32 0.0, %v1681
        %v1683 = vpop.f32.mrf.mxu0
        %1684 = vmatprep.mubr.f32.mxu0 0.0
        %1685 = vmatmul.mubr.f32.gmra.mxu0 %v1613
        %v1686 = vpop.f32.mrf.mxu0
        %v1687 = vadd.f32 0.0, %v1686
        %v1688 = vpop.f32.mrf.mxu0
        %1689 = vdwg.mxu0
        %1690 = vrot.lane.b32.xlu0 %v1046, 32
        %v1691 = vpop.permute.xlu0 %1690
        %1692 = vrot.lane.b32.xlu0 %v1047, 32
        %v1693 = vpop.permute.xlu0 %1692
        %1694 = vrot.lane.b32.xlu0 %v995, 32
        %v1695 = vpop.permute.xlu0 %1694
        %1696 = vrot.lane.b32.xlu0 %v1001, 32
        %v1697 = vpop.permute.xlu0 %1696
        %v1698 = vsel %vm1048, %v1691, 0
        %v1700 = vsel %vm1048, %v1693, 0
        %v1702 = vsel %vm1048, %v1695, 0
        %v1704 = vsel %vm1048, %v1697, 0
        %1706 = vmatprep.subr.mxu0 0.0
        %1707 = vmatpush1.xpose.msra.mxu0 0.0
        %1708 = vmatprep.subr.mxu0 0.0
        %1709 = vmatpush1.xpose.msra.mxu0 0.0
        %1710 = vmatprep.subr.mxu0 0.0
        %1711 = vmatpush1.xpose.msra.mxu0 0.0
        %1712 = vmatprep.subr.mxu0 0.0
        %1713 = vmatpush1.xpose.msra.mxu0 0.0
        %1714 = vmatprep.subr.mxu0 0.0
        %1715 = vmatpush1.xpose.msra.mxu0 0.0
        %1716 = vmatprep.subr.mxu0 0.0
        %1717 = vmatpush1.xpose.msra.mxu0 0.0
        %1718 = vmatprep.subr.mxu0 0.0
        %1719 = vmatpush1.xpose.msra.mxu0 0.0
        %1720 = vmatprep.subr.mxu0 0.0
        %1721 = vmatpush1.xpose.msra.mxu0 0.0
        %1722 = vmatprep.subr.mxu0 0.0
        %1723 = vmatpush1.xpose.msra.mxu0 0.0
        %1724 = vmatprep.subr.mxu0 0.0
        %1725 = vmatpush1.xpose.msra.mxu0 0.0
        %1726 = vmatprep.subr.mxu0 0.0
        %1727 = vmatpush1.xpose.msra.mxu0 0.0
        %1728 = vmatprep.subr.mxu0 0.0
        %1729 = vmatpush1.xpose.msra.mxu0 0.0
        %1730 = vmatprep.subr.mxu0 0.0
        %1731 = vmatpush1.xpose.msra.mxu0 0.0
        %1732 = vmatprep.subr.mxu0 0.0
        %1733 = vmatpush1.xpose.msra.mxu0 0.0
        %1734 = vmatprep.subr.mxu0 0.0
        %1735 = vmatpush1.xpose.msra.mxu0 %v1704
        %1736 = vmatprep.subr.mxu0 0.0
        %1737 = vmatpush1.xpose.msra.mxu0 %v1702
        %1738 = vmatprep.subr.mxu0 0.0
        %1739 = vmatpush2.xpose.msra.mxu0 0.0
        %1740 = vmatprep.subr.mxu0 0.0
        %1741 = vmatpush2.xpose.msra.mxu0 0.0
        %1742 = vmatprep.subr.mxu0 0.0
        %1743 = vmatpush2.xpose.msra.mxu0 0.0
        %1744 = vmatprep.subr.mxu0 0.0
        %1745 = vmatpush2.xpose.msra.mxu0 0.0
        %1746 = vmatprep.subr.mxu0 0.0
        %1747 = vmatpush2.xpose.msra.mxu0 0.0
        %1748 = vmatprep.subr.mxu0 0.0
        %1749 = vmatpush2.xpose.msra.mxu0 0.0
        %1750 = vmatprep.subr.mxu0 0.0
        %1751 = vmatpush2.xpose.msra.mxu0 0.0
        %1752 = vmatprep.subr.mxu0 0.0
        %1753 = vmatpush2.xpose.msra.mxu0 0.0
        %1754 = vmatprep.subr.mxu0 0.0
        %1755 = vmatpush2.xpose.msra.mxu0 0.0
        %1756 = vmatprep.subr.mxu0 0.0
        %1757 = vmatpush2.xpose.msra.mxu0 0.0
        %1758 = vmatprep.subr.mxu0 0.0
        %1759 = vmatpush2.xpose.msra.mxu0 0.0
        %1760 = vmatprep.subr.mxu0 0.0
        %1761 = vmatpush2.xpose.msra.mxu0 0.0
        %1762 = vmatprep.subr.mxu0 0.0
        %1763 = vmatpush2.xpose.msra.mxu0 0.0
        %1764 = vmatprep.subr.mxu0 0.0
        %1765 = vmatpush2.xpose.msra.mxu0 0.0
        %1766 = vmatprep.subr.mxu0 0.0
        %1767 = vmatpush2.xpose.msra.mxu0 0.0
        %1768 = vmatprep.subr.mxu0 0.0
        %1769 = vmatpush2.xpose.msra.mxu0 0.0
        %1770 = vmatprep.mubr.f32.mxu0 0.0
        %1771 = vmatmul.mubr.f32.gmra.mxu0 %v1698
        %v1772 = vpop.f32.mrf.mxu0
        %v1773 = vadd.f32 0.0, %v1772
        %v1774 = vpop.f32.mrf.mxu0
        %1775 = vmatprep.mubr.f32.mxu0 0.0
        %1776 = vmatmul.mubr.f32.gmra.mxu0 %v1700
        %v1777 = vpop.f32.mrf.mxu0
        %v1778 = vadd.f32 0.0, %v1777
        %v1779 = vpop.f32.mrf.mxu0
        %1780 = vdwg.mxu0
        %v1781 = vmax.f32 %v1773, -100.0
        %v1782 = vmax.f32 %v1778, -100.0
        %v1783 = vmin.f32 %v1781, 100.0
        %v1784 = vmin.f32 %v1782, 100.0
        %v1785 = vsel %vm779, -10000.0, %v1783
        %v1786 = vsel %vm780, -10000.0, %v1784
        %v1787 = vsel %vm1142, %v1785, -inf
        %1788 = vmax.xlane.f32.xlu0 %v1787
        %v1789 = vpop.xlane.xlu0 %1788
        %v1790 = vsel %vm1142, %v1786, -inf
        %1791 = vmax.xlane.f32.xlu0 %v1790
        %v1792 = vpop.xlane.xlu0 %1791
        %v1793 = vsub.f32 %v1785, %v1789
        %v1794 = vsub.f32 %v1786, %v1792
        %v1795 = vmul.f32 %v1793, 1.442695
        %v1796 = vpow.pop %v1795
        %v1797 = vmul.f32 %v1794, 1.442695
        %v1798 = vpow.pop %v1797
        %v1799 = vsel %vm1142, %v1796, 0.0
        %1800 = vadd.xlane.f32.xlu0 %v1799
        %v1801 = vpop.xlane.xlu0 %1800
        %v1802 = vsel %vm1142, %v1798, 0.0
        %1803 = vadd.xlane.f32.xlu0 %v1802
        %v1804 = vpop.xlane.xlu0 %1803
        %v1805 = vrcp.pop %v1801
        %v1806 = vrcp.pop %v1804
        %v1807 = vmul.f32 %v1796, %v1805
        %v1808 = vmul.f32 %v1798, %v1806
        %v1809 = vmul.f32 %v1801, %v1805
        %v1810 = vmul.f32 %v1804, %v1806
        %v1811 = vadd.f32 %v1809, 1.6e-05
        %v1812 = vadd.f32 %v1810, 1.6e-05
        %v1813 = vrcp.pop %v1811
        %v1814 = vrcp.pop %v1812
        %v1815 = vadd.f32 %v1807, 1e-06
        %v1816 = vadd.f32 %v1808, 1e-06
        %v1817 = vmul.f32 %v1815, %v1813
        %v1818 = vmul.f32 %v1816, %v1814
        %1819 = vrot.lane.b32.xlu0 %v1038, 32
        %v1820 = vpop.permute.xlu0 %1819
        %1821 = vrot.lane.b32.xlu0 %v1043, 32
        %v1822 = vpop.permute.xlu0 %1821
        %v1826 = vsel %vm1142, %v1817, 0
        %v1829 = vsel %vm1142, %v1818, 0
        %1831 = vmatprep.subr.mxu0 0.0
        %1832 = vmatpush1.msra.mxu0 0.0
        %1833 = vmatprep.subr.mxu0 0.0
        %1834 = vmatpush1.msra.mxu0 0.0
        %1835 = vmatprep.subr.mxu0 0.0
        %1836 = vmatpush1.msra.mxu0 0.0
        %1837 = vmatprep.subr.mxu0 0.0
        %1838 = vmatpush1.msra.mxu0 0.0
        %1839 = vmatprep.subr.mxu0 0.0
        %1840 = vmatpush1.msra.mxu0 0.0
        %1841 = vmatprep.subr.mxu0 0.0
        %1842 = vmatpush1.msra.mxu0 0.0
        %1843 = vmatprep.subr.mxu0 0.0
        %1844 = vmatpush1.msra.mxu0 0.0
        %1845 = vmatprep.subr.mxu0 0.0
        %1846 = vmatpush1.msra.mxu0 0.0
        %1847 = vmatprep.subr.mxu0 0.0
        %1848 = vmatpush1.msra.mxu0 0.0
        %1849 = vmatprep.subr.mxu0 0.0
        %1850 = vmatpush1.msra.mxu0 0.0
        %1851 = vmatprep.subr.mxu0 0.0
        %1852 = vmatpush1.msra.mxu0 0.0
        %1853 = vmatprep.subr.mxu0 0.0
        %1854 = vmatpush1.msra.mxu0 0.0
        %1855 = vmatprep.subr.mxu0 0.0
        %1856 = vmatpush1.msra.mxu0 0.0
        %1857 = vmatprep.subr.mxu0 0.0
        %1858 = vmatpush1.msra.mxu0 0.0
        %1859 = vmatprep.subr.mxu0 0.0
        %1860 = vmatpush1.msra.mxu0 %v1822
        %1861 = vmatprep.subr.mxu0 0.0
        %1862 = vmatpush1.msra.mxu0 %v1820
        %1863 = vmatprep.subr.mxu0 0.0
        %1864 = vmatpush2.msra.mxu0 0.0
        %1865 = vmatprep.subr.mxu0 0.0
        %1866 = vmatpush2.msra.mxu0 0.0
        %1867 = vmatprep.subr.mxu0 0.0
        %1868 = vmatpush2.msra.mxu0 0.0
        %1869 = vmatprep.subr.mxu0 0.0
        %1870 = vmatpush2.msra.mxu0 0.0
        %1871 = vmatprep.subr.mxu0 0.0
        %1872 = vmatpush2.msra.mxu0 0.0
        %1873 = vmatprep.subr.mxu0 0.0
        %1874 = vmatpush2.msra.mxu0 0.0
        %1875 = vmatprep.subr.mxu0 0.0
        %1876 = vmatpush2.msra.mxu0 0.0
        %1877 = vmatprep.subr.mxu0 0.0
        %1878 = vmatpush2.msra.mxu0 0.0
        %1879 = vmatprep.subr.mxu0 0.0
        %1880 = vmatpush2.msra.mxu0 0.0
        %1881 = vmatprep.subr.mxu0 0.0
        %1882 = vmatpush2.msra.mxu0 0.0
        %1883 = vmatprep.subr.mxu0 0.0
        %1884 = vmatpush2.msra.mxu0 0.0
        %1885 = vmatprep.subr.mxu0 0.0
        %1886 = vmatpush2.msra.mxu0 0.0
        %1887 = vmatprep.subr.mxu0 0.0
        %1888 = vmatpush2.msra.mxu0 0.0
        %1889 = vmatprep.subr.mxu0 0.0
        %1890 = vmatpush2.msra.mxu0 0.0
        %1891 = vmatprep.subr.mxu0 0.0
        %1892 = vmatpush2.msra.mxu0 0.0
        %1893 = vmatprep.subr.mxu0 0.0
        %1894 = vmatpush2.msra.mxu0 0.0
        %1895 = vmatprep.mubr.f32.mxu0 0.0
        %1896 = vmatmul.mubr.f32.gmra.mxu0 %v1826
        %v1897 = vpop.f32.mrf.mxu0
        %v1898 = vadd.f32 0.0, %v1897
        %v1899 = vpop.f32.mrf.mxu0
        %1900 = vmatprep.mubr.f32.mxu0 0.0
        %1901 = vmatmul.mubr.f32.gmra.mxu0 %v1829
        %v1902 = vpop.f32.mrf.mxu0
        %v1903 = vadd.f32 0.0, %v1902
        %v1904 = vpop.f32.mrf.mxu0
        %1905 = vdwg.mxu0
        %1908 = vrot.lane.b32.xlu0 %v1466, 32
        %v1909 = vpop.permute.xlu0 %1908
        %1910 = vrot.lane.b32.xlu0 %v1471, 32
        %v1911 = vpop.permute.xlu0 %1910
        %1916 = vrot.lane.b32.xlu0 %v1682, 64
        %v1917 = vpop.permute.xlu0 %1916
        %1918 = vrot.lane.b32.xlu0 %v1687, 64
        %v1919 = vpop.permute.xlu0 %1918
        %1924 = vrot.lane.b32.xlu0 %v1898, 96
        %v1925 = vpop.permute.xlu0 %1924
        %1926 = vrot.lane.b32.xlu0 %v1903, 96
        %v1927 = vpop.permute.xlu0 %1926
        %v1930 = vsel %vm1048, %v1248, %v1909
        %v1931 = vsel %vm1048, %v1253, %v1911
        %vm1932 = vcmask 523264
        %v1933 = vsel %vm1932, %v1930, %v1917
        %v1934 = vsel %vm1932, %v1931, %v1919
        %vm1935 = vcmask 785408
        %v1936 = vsel %vm1935, %v1933, %v1925
        %v1937 = vsel %vm1935, %v1934, %v1927
        %v1938 = vld [vmem:[%s624] sm:$0xf]
        %v1939 = vld [vmem:[%s624 + $0x4] sm:$0xf]
        %v1940 = vld [vmem:[%s624 + $0x8] sm:$0xf]
        %v1941 = vld [vmem:[%s624 + $0xc] sm:$0xf]
        %v1942 = vld [vmem:[%s624 + $0x10] sm:$0xf]
        %v1943 = vld [vmem:[%s624 + $0x14] sm:$0xf]
        %v1944 = vld [vmem:[%s624 + $0x18] sm:$0xf]
        %v1945 = vld [vmem:[%s624 + $0x1c] sm:$0xf]
        %v1946 = vld [vmem:[%s624 + $0x20] sm:$0xf]
        %v1947 = vld [vmem:[%s624 + $0x24] sm:$0xf]
        %v1948 = vld [vmem:[%s624 + $0x28] sm:$0xf]
        %v1949 = vld [vmem:[%s624 + $0x2c] sm:$0xf]
        %v1950 = vld [vmem:[%s624 + $0x30] sm:$0xf]
        %v1951 = vld [vmem:[%s624 + $0x34] sm:$0xf]
        %v1952 = vld [vmem:[%s624 + $0x38] sm:$0xf]
        %v1953 = vld [vmem:[%s624 + $0x3c] sm:$0xf]
        %v1954 = vld [vmem:[%s650] sm:$0x1]
        %v1956 = vlaneseq
        %v1957 = vshrl.u32 %v1956, 7
        %v1958 = vsub.s32 0, %v1957
        %v1959 = vrot.slane %v1954, %v1958
        %v1977 = vunpack.c.l.b16 %v1938
        %v1978 = vunpack.c.l.b16 %v1939
        %v1979 = vunpack.c.l.b16 %v1940
        %v1980 = vunpack.c.l.b16 %v1941
        %v1981 = vunpack.c.l.b16 %v1942
        %v1982 = vunpack.c.l.b16 %v1943
        %v1983 = vunpack.c.l.b16 %v1944
        %v1984 = vunpack.c.l.b16 %v1945
        %v1985 = vunpack.c.l.b16 %v1946
        %v1986 = vunpack.c.l.b16 %v1947
        %v1987 = vunpack.c.l.b16 %v1948
        %v1988 = vunpack.c.l.b16 %v1949
        %v1989 = vunpack.c.l.b16 %v1950
        %v1990 = vunpack.c.l.b16 %v1951
        %v1991 = vunpack.c.l.b16 %v1952
        %v1992 = vunpack.c.l.b16 %v1953
        %v1993 = vpack.c.b16 %v1978, %v1977
        %v1994 = vpack.c.b16 %v1980, %v1979
        %v1995 = vpack.c.b16 %v1982, %v1981
        %v1996 = vpack.c.b16 %v1984, %v1983
        %v1997 = vpack.c.b16 %v1986, %v1985
        %v1998 = vpack.c.b16 %v1988, %v1987
        %v1999 = vpack.c.b16 %v1990, %v1989
        %v2000 = vpack.c.b16 %v1992, %v1991
        %2009 = vmatprep.subr.bf16.mxu0 0
        %2010 = vmatpush1.bf16.msra.mxu0 %v2000
        %2011 = vmatprep.subr.bf16.mxu0 0
        %2012 = vmatpush1.bf16.msra.mxu0 %v1999
        %2013 = vmatprep.subr.bf16.mxu0 0
        %2014 = vmatpush1.bf16.msra.mxu0 %v1998
        %2015 = vmatprep.subr.bf16.mxu0 0
        %2016 = vmatpush1.bf16.msra.mxu0 %v1997
        %2017 = vmatprep.subr.bf16.mxu0 0
        %2018 = vmatpush1.bf16.msra.mxu0 %v1996
        %2019 = vmatprep.subr.bf16.mxu0 0
        %2020 = vmatpush1.bf16.msra.mxu0 %v1995
        %2021 = vmatprep.subr.bf16.mxu0 0
        %2022 = vmatpush1.bf16.msra.mxu0 %v1994
        %2023 = vmatprep.subr.bf16.mxu0 0
        %2024 = vmatpush1.bf16.msra.mxu0 %v1993
        %2025 = vmatprep.subr.bf16.mxu0 0
        %2026 = vmatpush2.bf16.msra.mxu0 0
        %2027 = vmatprep.subr.bf16.mxu0 0
        %2028 = vmatpush2.bf16.msra.mxu0 0
        %2029 = vmatprep.subr.bf16.mxu0 0
        %2030 = vmatpush2.bf16.msra.mxu0 0
        %2031 = vmatprep.subr.bf16.mxu0 0
        %2032 = vmatpush2.bf16.msra.mxu0 0
        %2033 = vmatprep.subr.bf16.mxu0 0
        %2034 = vmatpush2.bf16.msra.mxu0 0
        %2035 = vmatprep.subr.bf16.mxu0 0
        %2036 = vmatpush2.bf16.msra.mxu0 0
        %2037 = vmatprep.subr.bf16.mxu0 0
        %2038 = vmatpush2.bf16.msra.mxu0 0
        %2039 = vmatprep.subr.bf16.mxu0 0
        %2040 = vmatpush2.bf16.msra.mxu0 0
        %2041 = vmatprep.mubr.f32.mxu0 0.0
        %2042 = vmatmul.mubr.f32.gmra.mxu0 %v1936
        %v2043 = vpop.f32.mrf.mxu0
        %v2044 = vadd.f32 %v1959, %v2043
        %v2045 = vpop.f32.mrf.mxu0
        %2046 = vmatprep.mubr.f32.mxu0 0.0
        %2047 = vmatmul.mubr.f32.gmra.mxu0 %v1937
        %v2048 = vpop.f32.mrf.mxu0
        %v2049 = vadd.f32 %v1959, %v2048
        %v2050 = vpop.f32.mrf.mxu0
        %2051 = vdwg.mxu0
        %v2052 = vld [vmem:[%s746] sm:$0x1]
        %v2053 = vld [vmem:[%s749] sm:$0x1]
        %2054 = vadd.xlane.f32.xlu0 %v2044
        %v2055 = vpop.xlane.xlu0 %2054
        %2056 = vadd.xlane.f32.xlu0 %v2049
        %v2057 = vpop.xlane.xlu0 %2056
        %v2058 = vrcp.pop 128.0
        %v2059 = vmul.f32 %v2055, %v2058
        %v2060 = vmul.f32 %v2057, %v2058
        %v2061 = vsub.f32 %v2044, %v2059
        %v2062 = vsub.f32 %v2049, %v2060
        %v2063 = vmul.f32 %v2061, %v2061
        %v2064 = vmul.f32 %v2062, %v2062
        %2065 = vadd.xlane.f32.xlu0 %v2063
        %v2066 = vpop.xlane.xlu0 %2065
        %2067 = vadd.xlane.f32.xlu0 %v2064
        %v2068 = vpop.xlane.xlu0 %2067
        %v2069 = vmul.f32 %v2066, %v2058
        %v2070 = vmul.f32 %v2068, %v2058
        %v2071 = vadd.f32 %v2069, 1e-05
        %v2072 = vadd.f32 %v2070, 1e-05
        %v2073 = vrsqrt.pop %v2071
        %v2074 = vrsqrt.pop %v2072
        %v2075 = vmul.f32 %v2061, %v2073
        %v2076 = vmul.f32 %v2062, %v2074
        %v2078 = vlaneseq
        %v2079 = vshrl.u32 %v2078, 7
        %v2080 = vsub.s32 0, %v2079
        %v2081 = vrot.slane %v2052, %v2080
        %v2083 = vmul.f32 %v2075, %v2081
        %v2084 = vmul.f32 %v2076, %v2081
        %v2086 = vlaneseq
        %v2087 = vshrl.u32 %v2086, 7
        %v2088 = vsub.s32 0, %v2087
        %v2089 = vrot.slane %v2053, %v2088
        %v2091 = vadd.f32 %v2083, %v2089
        %v2092 = vadd.f32 %v2084, %v2089
        %v2093 = vadd.f32 %v772, %v2091
        %v2094 = vadd.f32 %v773, %v2092
        %v2095 = vld [vmem:[%s633] sm:$0xff]
        %v2096 = vld [vmem:[%s633 + $0x8] sm:$0xff]
        %v2097 = vld [vmem:[%s633 + $0x10] sm:$0xff]
        %v2098 = vld [vmem:[%s633 + $0x18] sm:$0xff]
        %v2099 = vld [vmem:[%s633 + $0x20] sm:$0xff]
        %v2100 = vld [vmem:[%s633 + $0x28] sm:$0xff]
        %v2101 = vld [vmem:[%s633 + $0x30] sm:$0xff]
        %v2102 = vld [vmem:[%s633 + $0x38] sm:$0xff]
        %v2103 = vld [vmem:[%s633 + $0x40] sm:$0xff]
        %v2104 = vld [vmem:[%s633 + $0x48] sm:$0xff]
        %v2105 = vld [vmem:[%s633 + $0x50] sm:$0xff]
        %v2106 = vld [vmem:[%s633 + $0x58] sm:$0xff]
        %v2107 = vld [vmem:[%s633 + $0x60] sm:$0xff]
        %v2108 = vld [vmem:[%s633 + $0x68] sm:$0xff]
        %v2109 = vld [vmem:[%s633 + $0x70] sm:$0xff]
        %v2110 = vld [vmem:[%s633 + $0x78] sm:$0xff]
        %v2111 = vld [vmem:[%s753] sm:$0x3]
        %v2113 = vlaneseq
        %v2114 = vshrl.u32 %v2113, 7
        %v2115 = vsub.s32 0, %v2114
        %v2116 = vrot.slane %v2111, %v2115
        %v2117 = vlaneseq
        %v2118 = vshrl.u32 %v2117, 7
        %v2119 = vsub.s32 1, %v2118
        %v2120 = vrot.slane %v2111, %v2119
        %v2139 = vunpack.c.l.b16 %v2095
        %v2140 = vunpack.c.h.b16 %v2095
        %v2141 = vunpack.c.l.b16 %v2096
        %v2142 = vunpack.c.h.b16 %v2096
        %v2143 = vunpack.c.l.b16 %v2097
        %v2144 = vunpack.c.h.b16 %v2097
        %v2145 = vunpack.c.l.b16 %v2098
        %v2146 = vunpack.c.h.b16 %v2098
        %v2147 = vunpack.c.l.b16 %v2099
        %v2148 = vunpack.c.h.b16 %v2099
        %v2149 = vunpack.c.l.b16 %v2100
        %v2150 = vunpack.c.h.b16 %v2100
        %v2151 = vunpack.c.l.b16 %v2101
        %v2152 = vunpack.c.h.b16 %v2101
        %v2153 = vunpack.c.l.b16 %v2102
        %v2154 = vunpack.c.h.b16 %v2102
        %v2155 = vunpack.c.l.b16 %v2103
        %v2156 = vunpack.c.h.b16 %v2103
        %v2157 = vunpack.c.l.b16 %v2104
        %v2158 = vunpack.c.h.b16 %v2104
        %v2159 = vunpack.c.l.b16 %v2105
        %v2160 = vunpack.c.h.b16 %v2105
        %v2161 = vunpack.c.l.b16 %v2106
        %v2162 = vunpack.c.h.b16 %v2106
        %v2163 = vunpack.c.l.b16 %v2107
        %v2164 = vunpack.c.h.b16 %v2107
        %v2165 = vunpack.c.l.b16 %v2108
        %v2166 = vunpack.c.h.b16 %v2108
        %v2167 = vunpack.c.l.b16 %v2109
        %v2168 = vunpack.c.h.b16 %v2109
        %v2169 = vunpack.c.l.b16 %v2110
        %v2170 = vunpack.c.h.b16 %v2110
        %v2171 = vpack.c.b16 %v2141, %v2139
        %v2172 = vpack.c.b16 %v2142, %v2140
        %v2173 = vpack.c.b16 %v2145, %v2143
        %v2174 = vpack.c.b16 %v2146, %v2144
        %v2175 = vpack.c.b16 %v2149, %v2147
        %v2176 = vpack.c.b16 %v2150, %v2148
        %v2177 = vpack.c.b16 %v2153, %v2151
        %v2178 = vpack.c.b16 %v2154, %v2152
        %v2179 = vpack.c.b16 %v2157, %v2155
        %v2180 = vpack.c.b16 %v2158, %v2156
        %v2181 = vpack.c.b16 %v2161, %v2159
        %v2182 = vpack.c.b16 %v2162, %v2160
        %v2183 = vpack.c.b16 %v2165, %v2163
        %v2184 = vpack.c.b16 %v2166, %v2164
        %v2185 = vpack.c.b16 %v2169, %v2167
        %v2186 = vpack.c.b16 %v2170, %v2168
        %2203 = vmatprep.subr.bf16.mxu0 %v2186
        %2204 = vmatpush1.bf16.msra.mxu0 %v2185
        %2205 = vmatprep.subr.bf16.mxu0 %v2184
        %2206 = vmatpush1.bf16.msra.mxu0 %v2183
        %2207 = vmatprep.subr.bf16.mxu0 %v2182
        %2208 = vmatpush1.bf16.msra.mxu0 %v2181
        %2209 = vmatprep.subr.bf16.mxu0 %v2180
        %2210 = vmatpush1.bf16.msra.mxu0 %v2179
        %2211 = vmatprep.subr.bf16.mxu0 %v2178
        %2212 = vmatpush1.bf16.msra.mxu0 %v2177
        %2213 = vmatprep.subr.bf16.mxu0 %v2176
        %2214 = vmatpush1.bf16.msra.mxu0 %v2175
        %2215 = vmatprep.subr.bf16.mxu0 %v2174
        %2216 = vmatpush1.bf16.msra.mxu0 %v2173
        %2217 = vmatprep.subr.bf16.mxu0 %v2172
        %2218 = vmatpush1.bf16.msra.mxu0 %v2171
        %2219 = vmatprep.subr.bf16.mxu0 0
        %2220 = vmatpush2.bf16.msra.mxu0 0
        %2221 = vmatprep.subr.bf16.mxu0 0
        %2222 = vmatpush2.bf16.msra.mxu0 0
        %2223 = vmatprep.subr.bf16.mxu0 0
        %2224 = vmatpush2.bf16.msra.mxu0 0
        %2225 = vmatprep.subr.bf16.mxu0 0
        %2226 = vmatpush2.bf16.msra.mxu0 0
        %2227 = vmatprep.subr.bf16.mxu0 0
        %2228 = vmatpush2.bf16.msra.mxu0 0
        %2229 = vmatprep.subr.bf16.mxu0 0
        %2230 = vmatpush2.bf16.msra.mxu0 0
        %2231 = vmatprep.subr.bf16.mxu0 0
        %2232 = vmatpush2.bf16.msra.mxu0 0
        %2233 = vmatprep.subr.bf16.mxu0 0
        %2234 = vmatpush2.bf16.msra.mxu0 0
        %2235 = vmatprep.mubr.f32.mxu0 0.0
        %2236 = vmatmul.mubr.f32.gmra.mxu0 %v2093
        %v2237 = vpop.f32.mrf.mxu0
        %v2238 = vadd.f32 %v2116, %v2237
        %v2239 = vpop.f32.mrf.mxu0
        %v2240 = vadd.f32 %v2120, %v2239
        %2241 = vmatprep.mubr.f32.mxu0 0.0
        %2242 = vmatmul.mubr.f32.gmra.mxu0 %v2094
        %v2243 = vpop.f32.mrf.mxu0
        %v2244 = vadd.f32 %v2116, %v2243
        %v2245 = vpop.f32.mrf.mxu0
        %v2246 = vadd.f32 %v2120, %v2245
        %2247 = vdwg.mxu0
        %v2248 = vmul.f32 %v2238, 0.5
        %v2249 = vmul.f32 %v2240, 0.5
        %v2250 = vmul.f32 %v2244, 0.5
        %v2251 = vmul.f32 %v2246, 0.5
        %v2252 = vmul.f32 %v2238, 0.044715
        %v2253 = vmul.f32 %v2240, 0.044715
        %v2254 = vmul.f32 %v2244, 0.044715
        %v2255 = vmul.f32 %v2246, 0.044715
        %v2256 = vmul.f32 %v2252, %v2238
        %v2257 = vmul.f32 %v2253, %v2240
        %v2258 = vmul.f32 %v2254, %v2244
        %v2259 = vmul.f32 %v2255, %v2246
        %v2260 = vmul.f32 %v2256, %v2238
        %v2261 = vmul.f32 %v2257, %v2240
        %v2262 = vmul.f32 %v2258, %v2244
        %v2263 = vmul.f32 %v2259, %v2246
        %v2264 = vadd.f32 %v2238, %v2260
        %v2265 = vadd.f32 %v2240, %v2261
        %v2266 = vadd.f32 %v2244, %v2262
        %v2267 = vadd.f32 %v2246, %v2263
        %v2268 = vmul.f32 %v2264, 0.7978846
        %v2269 = vmul.f32 %v2265, 0.7978846
        %v2270 = vmul.f32 %v2266, 0.7978846
        %v2271 = vmul.f32 %v2267, 0.7978846
        %v2272 = vtanh.pop %v2268
        %v2273 = vtanh.pop %v2269
        %v2274 = vtanh.pop %v2270
        %v2275 = vtanh.pop %v2271
        %v2276 = vadd.f32 %v2272, 1.0
        %v2277 = vadd.f32 %v2273, 1.0
        %v2278 = vadd.f32 %v2274, 1.0
        %v2279 = vadd.f32 %v2275, 1.0
        %v2280 = vmul.f32 %v2248, %v2276
        %v2281 = vmul.f32 %v2249, %v2277
        %v2282 = vmul.f32 %v2250, %v2278
        %v2283 = vmul.f32 %v2251, %v2279
        %v2284 = vld [vmem:[%s642] sm:$0xf]
        %v2285 = vld [vmem:[%s642 + $0x4] sm:$0xf]
        %v2286 = vld [vmem:[%s642 + $0x8] sm:$0xf]
        %v2287 = vld [vmem:[%s642 + $0xc] sm:$0xf]
        %v2288 = vld [vmem:[%s642 + $0x10] sm:$0xf]
        %v2289 = vld [vmem:[%s642 + $0x14] sm:$0xf]
        %v2290 = vld [vmem:[%s642 + $0x18] sm:$0xf]
        %v2291 = vld [vmem:[%s642 + $0x1c] sm:$0xf]
        %v2292 = vld [vmem:[%s642 + $0x20] sm:$0xf]
        %v2293 = vld [vmem:[%s642 + $0x24] sm:$0xf]
        %v2294 = vld [vmem:[%s642 + $0x28] sm:$0xf]
        %v2295 = vld [vmem:[%s642 + $0x2c] sm:$0xf]
        %v2296 = vld [vmem:[%s642 + $0x30] sm:$0xf]
        %v2297 = vld [vmem:[%s642 + $0x34] sm:$0xf]
        %v2298 = vld [vmem:[%s642 + $0x38] sm:$0xf]
        %v2299 = vld [vmem:[%s642 + $0x3c] sm:$0xf]
        %v2300 = vld [vmem:[%s642 + $0x40] sm:$0xf]
        %v2301 = vld [vmem:[%s642 + $0x44] sm:$0xf]
        %v2302 = vld [vmem:[%s642 + $0x48] sm:$0xf]
        %v2303 = vld [vmem:[%s642 + $0x4c] sm:$0xf]
        %v2304 = vld [vmem:[%s642 + $0x50] sm:$0xf]
        %v2305 = vld [vmem:[%s642 + $0x54] sm:$0xf]
        %v2306 = vld [vmem:[%s642 + $0x58] sm:$0xf]
        %v2307 = vld [vmem:[%s642 + $0x5c] sm:$0xf]
        %v2308 = vld [vmem:[%s642 + $0x60] sm:$0xf]
        %v2309 = vld [vmem:[%s642 + $0x64] sm:$0xf]
        %v2310 = vld [vmem:[%s642 + $0x68] sm:$0xf]
        %v2311 = vld [vmem:[%s642 + $0x6c] sm:$0xf]
        %v2312 = vld [vmem:[%s642 + $0x70] sm:$0xf]
        %v2313 = vld [vmem:[%s642 + $0x74] sm:$0xf]
        %v2314 = vld [vmem:[%s642 + $0x78] sm:$0xf]
        %v2315 = vld [vmem:[%s642 + $0x7c] sm:$0xf]
        %v2316 = vld [vmem:[%s756] sm:$0x1]
        %v2318 = vlaneseq
        %v2319 = vshrl.u32 %v2318, 7
        %v2320 = vsub.s32 0, %v2319
        %v2321 = vrot.slane %v2316, %v2320
        %v2355 = vunpack.c.l.b16 %v2284
        %v2356 = vunpack.c.l.b16 %v2285
        %v2357 = vunpack.c.l.b16 %v2286
        %v2358 = vunpack.c.l.b16 %v2287
        %v2359 = vunpack.c.l.b16 %v2288
        %v2360 = vunpack.c.l.b16 %v2289
        %v2361 = vunpack.c.l.b16 %v2290
        %v2362 = vunpack.c.l.b16 %v2291
        %v2363 = vunpack.c.l.b16 %v2292
        %v2364 = vunpack.c.l.b16 %v2293
        %v2365 = vunpack.c.l.b16 %v2294
        %v2366 = vunpack.c.l.b16 %v2295
        %v2367 = vunpack.c.l.b16 %v2296
        %v2368 = vunpack.c.l.b16 %v2297
        %v2369 = vunpack.c.l.b16 %v2298
        %v2370 = vunpack.c.l.b16 %v2299
        %v2371 = vunpack.c.l.b16 %v2300
        %v2372 = vunpack.c.l.b16 %v2301
        %v2373 = vunpack.c.l.b16 %v2302
        %v2374 = vunpack.c.l.b16 %v2303
        %v2375 = vunpack.c.l.b16 %v2304
        %v2376 = vunpack.c.l.b16 %v2305
        %v2377 = vunpack.c.l.b16 %v2306
        %v2378 = vunpack.c.l.b16 %v2307
        %v2379 = vunpack.c.l.b16 %v2308
        %v2380 = vunpack.c.l.b16 %v2309
        %v2381 = vunpack.c.l.b16 %v2310
        %v2382 = vunpack.c.l.b16 %v2311
        %v2383 = vunpack.c.l.b16 %v2312
        %v2384 = vunpack.c.l.b16 %v2313
        %v2385 = vunpack.c.l.b16 %v2314
        %v2386 = vunpack.c.l.b16 %v2315
        %v2387 = vpack.c.b16 %v2356, %v2355
        %v2388 = vpack.c.b16 %v2358, %v2357
        %v2389 = vpack.c.b16 %v2360, %v2359
        %v2390 = vpack.c.b16 %v2362, %v2361
        %v2391 = vpack.c.b16 %v2364, %v2363
        %v2392 = vpack.c.b16 %v2366, %v2365
        %v2393 = vpack.c.b16 %v2368, %v2367
        %v2394 = vpack.c.b16 %v2370, %v2369
        %v2395 = vpack.c.b16 %v2372, %v2371
        %v2396 = vpack.c.b16 %v2374, %v2373
        %v2397 = vpack.c.b16 %v2376, %v2375
        %v2398 = vpack.c.b16 %v2378, %v2377
        %v2399 = vpack.c.b16 %v2380, %v2379
        %v2400 = vpack.c.b16 %v2382, %v2381
        %v2401 = vpack.c.b16 %v2384, %v2383
        %v2402 = vpack.c.b16 %v2386, %v2385
        %2419 = vmatprep.subr.bf16.mxu0 0
        %2420 = vmatpush1.bf16.msra.mxu0 %v2394
        %2421 = vmatprep.subr.bf16.mxu0 0
        %2422 = vmatpush1.bf16.msra.mxu0 %v2393
        %2423 = vmatprep.subr.bf16.mxu0 0
        %2424 = vmatpush1.bf16.msra.mxu0 %v2392
        %2425 = vmatprep.subr.bf16.mxu0 0
        %2426 = vmatpush1.bf16.msra.mxu0 %v2391
        %2427 = vmatprep.subr.bf16.mxu0 0
        %2428 = vmatpush1.bf16.msra.mxu0 %v2390
        %2429 = vmatprep.subr.bf16.mxu0 0
        %2430 = vmatpush1.bf16.msra.mxu0 %v2389
        %2431 = vmatprep.subr.bf16.mxu0 0
        %2432 = vmatpush1.bf16.msra.mxu0 %v2388
        %2433 = vmatprep.subr.bf16.mxu0 0
        %2434 = vmatpush1.bf16.msra.mxu0 %v2387
        %2435 = vmatprep.subr.bf16.mxu0 0
        %2436 = vmatpush2.bf16.msra.mxu0 %v2402
        %2437 = vmatprep.subr.bf16.mxu0 0
        %2438 = vmatpush2.bf16.msra.mxu0 %v2401
        %2439 = vmatprep.subr.bf16.mxu0 0
        %2440 = vmatpush2.bf16.msra.mxu0 %v2400
        %2441 = vmatprep.subr.bf16.mxu0 0
        %2442 = vmatpush2.bf16.msra.mxu0 %v2399
        %2443 = vmatprep.subr.bf16.mxu0 0
        %2444 = vmatpush2.bf16.msra.mxu0 %v2398
        %2445 = vmatprep.subr.bf16.mxu0 0
        %2446 = vmatpush2.bf16.msra.mxu0 %v2397
        %2447 = vmatprep.subr.bf16.mxu0 0
        %2448 = vmatpush2.bf16.msra.mxu0 %v2396
        %2449 = vmatprep.subr.bf16.mxu0 0
        %2450 = vmatpush2.bf16.msra.mxu0 %v2395
        %2451 = vmatprep.mubr.f32.mxu0 %v2281
        %2452 = vmatmul.mubr.f32.gmra.mxu0 %v2280
        %v2453 = vpop.f32.mrf.mxu0
        %v2454 = vadd.f32 %v2321, %v2453
        %v2455 = vpop.f32.mrf.mxu0
        %2456 = vmatprep.mubr.f32.mxu0 %v2283
        %2457 = vmatmul.mubr.f32.gmra.mxu0 %v2282
        %v2458 = vpop.f32.mrf.mxu0
        %v2459 = vadd.f32 %v2321, %v2458
        %v2460 = vpop.f32.mrf.mxu0
        %2461 = vdwg.mxu0
        %v2462 = vld [vmem:[%s759] sm:$0x1]
        %v2463 = vld [vmem:[%s762] sm:$0x1]
        %2464 = vadd.xlane.f32.xlu0 %v2454
        %v2465 = vpop.xlane.xlu0 %2464
        %2466 = vadd.xlane.f32.xlu0 %v2459
        %v2467 = vpop.xlane.xlu0 %2466
        %v2468 = vmul.f32 %v2465, %v2058
        %v2469 = vmul.f32 %v2467, %v2058
        %v2470 = vsub.f32 %v2454, %v2468
        %v2471 = vsub.f32 %v2459, %v2469
        %v2472 = vmul.f32 %v2470, %v2470
        %v2473 = vmul.f32 %v2471, %v2471
        %2474 = vadd.xlane.f32.xlu0 %v2472
        %v2475 = vpop.xlane.xlu0 %2474
        %2476 = vadd.xlane.f32.xlu0 %v2473
        %v2477 = vpop.xlane.xlu0 %2476
        %v2478 = vmul.f32 %v2475, %v2058
        %v2479 = vmul.f32 %v2477, %v2058
        %v2480 = vadd.f32 %v2478, 1e-05
        %v2481 = vadd.f32 %v2479, 1e-05
        %v2482 = vrsqrt.pop %v2480
        %v2483 = vrsqrt.pop %v2481
        %v2484 = vmul.f32 %v2470, %v2482
        %v2485 = vmul.f32 %v2471, %v2483
        %v2487 = vlaneseq
        %v2488 = vshrl.u32 %v2487, 7
        %v2489 = vsub.s32 0, %v2488
        %v2490 = vrot.slane %v2462, %v2489
        %v2492 = vmul.f32 %v2484, %v2490
        %v2493 = vmul.f32 %v2485, %v2490
        %v2495 = vlaneseq
        %v2496 = vshrl.u32 %v2495, 7
        %v2497 = vsub.s32 0, %v2496
        %v2498 = vrot.slane %v2463, %v2497
        %v2500 = vadd.f32 %v2492, %v2498
        %v2501 = vadd.f32 %v2493, %v2498
        %v2502 = vadd.f32 %v2093, %v2500
        %v2503 = vadd.f32 %v2094, %v2501
        %2504 = vst [vmem:[#allocation2] sm:$0xff] %v2502
        %2505 = vst [vmem:[#allocation2 + $0x8] sm:$0xff] %v2503
        %p2506 = scmp.eq.s32.totalorder %s44, 1
        // Predicated region
        $region101: #{tpu_custom_call.1} parent=71 // pred_check
          %p2507 = pneg %p2506
        $region102: #{tpu_custom_call.1} parent=71 // pred_check_branch
          %2509 = sbr.rel (%p2507) target = $region104
        $region103: #{tpu_custom_call.1} parent=71 // pred_region
          %v2510 = vld [vmem:[#allocation2] sm:$0xff]
          %v2511 = vld [vmem:[#allocation2 + $0x8] sm:$0xff]
          %2512 = vst [vmem:[%s739] sm:$0xff] %v2510
          %2513 = vst [vmem:[%s739 + $0x8] sm:$0xff] %v2511
        $region104: #{tpu_custom_call.1} parent=71 // pred_fallthru
          _
        %s2514 = sand.u32 %s397, 1
        %s2515 = scalar_lea.sflag [#allocation5], %s2514
        %s2516 = sand.u32 %s397, 1
        %s2517 = smul.addr %s2516, 16
        %s2518 = scalar_lea.vmem [#allocation14], %s2517
        // Predicated region
        $region105: #{tpu_custom_call.1} parent=71 // pred_check
          %p2519 = pneg %p407
        $region106: #{tpu_custom_call.1} parent=71 // pred_check_branch
          %2521 = sbr.rel (%p2519) target = $region108
        $region107: #{tpu_custom_call.1} parent=71 // pred_region
          %s2523 = ssub.s32 256, 256
          %2524 = vsyncadd %s2515, %s2523
          %s2525 = smul.addr %s43, 2
          %s2526 = smul.addr %s2525, 128
          %s2527 = scalar_lea.hbm %s13, %s2526
          %s2528 = sshll.u32 %s2518, 4
          %s2529 = int_to_ptr.vmem [resolvable:$true] %s2528
          %2534 = dma.vmem_to_hbm [thread:$0]  %s2529, 256, %s2527, %s2515, 128, 128, 8
        $region108: #{tpu_custom_call.1} parent=71 // pred_fallthru
          _
      $region72: #{tpu_custom_call.1} parent=5 // pred_fallthru
        _
      %p2535 = scmp.le.s32.totalorder 2, %s34
      // Predicated region
      $region109: #{tpu_custom_call.1} parent=5 // pred_check
        %p2536 = pneg %p2535
      $region110: #{tpu_custom_call.1} parent=5 // pred_check_branch
        %2538 = sbr.rel (%p2536) target = $region112
      $region111: #{tpu_custom_call.1} parent=5 // pred_region
        %s2539 = ssub.s32 %s34, 2
        // Predicated region
        $region113: #{tpu_custom_call.1} parent=111 // pred_check
          %p2540 = pneg %p413
        $region114: #{tpu_custom_call.1} parent=111 // pred_check_branch
          %2542 = sbr.rel (%p2540) target = $region116
        $region115: #{tpu_custom_call.1} parent=111 // pred_region
          %s2543 = sand.u32 %s398, 1
          %s2544 = scalar_lea.sflag [#allocation5], %s2543
          %s2545 = sand.u32 %s398, 1
          %s2546 = smul.addr %s2545, 16
          %s2547 = scalar_lea.vmem [#allocation14], %s2546
          %2548 = dma.done %s2544, 256
        $region116: #{tpu_custom_call.1} parent=111 // pred_fallthru
          _
      $region112: #{tpu_custom_call.1} parent=5 // pred_fallthru
        _
    $region6: #{tpu_custom_call.1} parent=1 // loop_footer
      %s38 = sadd.s32 1, %s34
    $region7: #{tpu_custom_call.1} parent=1 // loop_footer_branch
      %33 = sbr.rel target = $region3
    $region8: #{tpu_custom_call.1} parent=1 // loop_exit
      _
    %2549 = vsyncpa [#allocation4], 1
    %s2550 = scalar_lea.sflag [#allocation4], 1
    %2551 = vsyncpa %s2550, 1
    %2552 = vsyncpa [#allocation7], 1
    %s2553 = scalar_lea.sflag [#allocation7], 1
    %2554 = vsyncpa %s2553, 1
    %2555 = vsyncpa [#allocation10], 1
    %s2556 = scalar_lea.sflag [#allocation10], 1
    %2557 = vsyncpa %s2556, 1
    %2558 = vsyncpa [#allocation13], 1
    %s2559 = scalar_lea.sflag [#allocation13], 1
    %2560 = vsyncpa %s2559, 1
    %2561 = vsyncpa [#allocation5], 1
    %s2562 = scalar_lea.sflag [#allocation5], 1
    %2563 = vsyncpa %s2562, 1

</llo_original>
